<compile_context>
chip_gen: v7x
topology: tpu7x:2x2x1
jax: 0.10.0
libtpu: 0.0.40
codegen_flags: <defaults>
</compile_context>

<pallas_src>
import functools

import jax
import jax.numpy as jnp
from jax.experimental import pallas as pl
from jax.experimental.pallas import tpu as pltpu


def _dft_matrices(n, modes):
    """Truncated real-DFT analysis (Fr, Fi) and synthesis (Gr, Gi) matrices.

    rfft (first `modes` bins):   X[k] = sum_n x[n] * (cos - i*sin)(2*pi*k*n/N)
    irfft with bins >= modes set to zero:
        x[n] = sum_k  Re(X[k]) * Gr[k,n] + Im(X[k]) * Gi[k,n]
        Gr[k,n] =  c_k * cos(2*pi*k*n/N) / N
        Gi[k,n] = -c_k * sin(2*pi*k*n/N) / N
        c_0 = 1, c_{N/2} = 1 (Nyquist, even N), c_k = 2 otherwise.
    """
    k = jnp.arange(modes, dtype=jnp.float32)
    t = jnp.arange(n, dtype=jnp.float32)
    ang_f = 2.0 * jnp.pi * jnp.outer(t, k) / n            # (N, modes)
    fr = jnp.cos(ang_f)
    fi = -jnp.sin(ang_f)

    special = (k == 0)
    if n % 2 == 0:
        special = special | (k == n // 2)
    c = jnp.where(special, 1.0, 2.0)                      # (modes,)
    ang_i = 2.0 * jnp.pi * jnp.outer(k, t) / n            # (modes, N)
    gr = (c[:, None] * jnp.cos(ang_i)) / n
    gi = (-c[:, None] * jnp.sin(ang_i)) / n
    return (fr.astype(jnp.float32), fi.astype(jnp.float32),
            gr.astype(jnp.float32), gi.astype(jnp.float32))


def _spectral_conv1d_kernel(x_ref, wr_ref, wi_ref,
                            fr_ref, fi_ref, gr_ref, gi_ref,
                            o_ref, *, c_in, c_out):
    """One batch tile of SpectralConv1d, fully resident in VMEM.

    x_ref : (c_in, bt, N)       channel-major input tile
    wr/wi : (c_in*c_out, modes) real/imag weight planes (row r = i*c_out + o)
    fr/fi : (N, modes)          truncated forward rDFT
    gr/gi : (modes, N)          truncated inverse rDFT synthesis
    o_ref : (c_out, bt, N)      channel-major output tile
    """
    fr = fr_ref[...]
    fi = fi_ref[...]
    gr = gr_ref[...]
    gi = gi_ref[...]

    # ---- Stage 1: truncated forward real DFT (MXU), per input channel. ----
    xfr = []
    xfi = []
    for i in range(c_in):
        xi = x_ref[i].astype(jnp.float32)                                  # (bt, N)
        xfr.append(jnp.dot(xi, fr, preferred_element_type=jnp.float32))    # (bt, modes)
        xfi.append(jnp.dot(xi, fi, preferred_element_type=jnp.float32))

    # ---- Stage 2 + 3: per-mode complex channel mix, then inverse DFT. ----
    # TODO(synk): for large channel counts switch this unrolled VPU MAC loop
    # to a modes-batched einsum; fine for the small channel counts used here.
    for o in range(c_out):
        ofr = jnp.zeros_like(xfr[0])                                       # (bt, modes)
        ofi = jnp.zeros_like(xfi[0])
        for i in range(c_in):
            r = i * c_out + o
            wr = wr_ref[pl.ds(r, 1), :]                                    # (1, modes)
            wi = wi_ref[pl.ds(r, 1), :]
            # (a + i b)(c + i d) = (ac - bd) + i(ad + bc), summed over i
            ofr = ofr + xfr[i] * wr - xfi[i] * wi
            ofi = ofi + xfr[i] * wi + xfi[i] * wr
        y = (jnp.dot(ofr, gr, preferred_element_type=jnp.float32)
             + jnp.dot(ofi, gi, preferred_element_type=jnp.float32))       # (bt, N)
        o_ref[o] = y.astype(o_ref.dtype)                                   # lane-dense store


def spectral_conv1d_forward(x, w_real, w_imag, *, batch_tile=None):
    """x: (B, C_in, N) float; w_real/w_imag: (C_in, C_out, modes) float."""
    B, C_in, N = x.shape
    c_in_w, C_out, modes = w_real.shape
    assert c_in_w == C_in, "weight in_channels mismatch"
    assert 1 <= modes <= N // 2 + 1, "modes must be <= N//2 + 1"

    fr, fi, gr, gi = _dft_matrices(N, modes)

    # Channel-major layout so the kernel reads contiguous (bt, N) tiles per
    # channel; flatten (C_in, C_out) weight planes to 2-D for simple slicing.
    xt = jnp.transpose(x, (1, 0, 2))                                   # (C_in, B, N)
    wr2 = w_real.reshape(C_in * C_out, modes).astype(jnp.float32)
    wi2 = w_imag.reshape(C_in * C_out, modes).astype(jnp.float32)

    # Tiny batches: single grid step (no pipeline overhead). Large batches:
    # tile the batch (tile must be a multiple of 8 sublanes) on a parallel axis.
    if batch_tile is None or batch_tile >= B:
        bt = B
    else:
        bt = batch_tile
        assert B % bt == 0 and bt % 8 == 0, \
            "batch_tile must divide B and be a multiple of 8"
    grid = (B // bt,)

    kernel = functools.partial(_spectral_conv1d_kernel, c_in=C_in, c_out=C_out)

    out_t = pl.pallas_call(
        kernel,
        out_shape=jax.ShapeDtypeStruct((C_out, B, N), x.dtype),
        grid_spec=pltpu.PrefetchScalarGridSpec(
            num_scalar_prefetch=0,
            grid=grid,
            in_specs=[
                pl.BlockSpec((C_in, bt, N), lambda b: (0, b, 0)),          # x tile
                pl.BlockSpec((C_in * C_out, modes), lambda b: (0, 0)),     # W real
                pl.BlockSpec((C_in * C_out, modes), lambda b: (0, 0)),     # W imag
                pl.BlockSpec((N, modes), lambda b: (0, 0)),                # Fr
                pl.BlockSpec((N, modes), lambda b: (0, 0)),                # Fi
                pl.BlockSpec((modes, N), lambda b: (0, 0)),                # Gr
                pl.BlockSpec((modes, N), lambda b: (0, 0)),                # Gi
            ],
            out_specs=pl.BlockSpec((C_out, bt, N), lambda b: (0, b, 0)),
        ),
        compiler_params=pltpu.CompilerParams(
            dimension_semantics=("parallel",)),
    )(xt, wr2, wi2, fr, fi, gr, gi)

    return jnp.transpose(out_t, (1, 0, 2))                             # (B, C_out, N)


def spectral_conv1d_reference(x, w_real, w_imag):
    """Pure-JAX reference mirroring the PyTorch module (complex64)."""
    w = w_real.astype(jnp.complex64) + 1j * w_imag.astype(jnp.complex64)
    B, _, N = x.shape
    modes = w.shape[-1]
    x_ft = jnp.fft.rfft(x)                                             # (B, Cin, N//2+1)
    mixed = jnp.einsum('bix,iox->box', x_ft[:, :, :modes], w,
                       precision=jax.lax.Precision.HIGHEST)
    out_ft = jnp.zeros((B, w.shape[1], x_ft.shape[-1]), dtype=x_ft.dtype)
    out_ft = out_ft.at[:, :, :modes].set(mixed)
    return jnp.fft.irfft(out_ft, n=N)


if __name__ == "__main__":
    key = jax.random.PRNGKey(0)
    B, C_in, C_out, N, modes = 2, 4, 4, 16, 8

    kx, kr, ki = jax.random.split(key, 3)
    x = jax.random.normal(kx, (B, C_in, N), jnp.float32)
    scale = 1.0 / (C_in * C_out)
    # torch.rand(..., dtype=cdouble): real & imag uniform on [0, 1), scaled.
    w_real = scale * jax.random.uniform(kr, (C_in, C_out, modes), jnp.float32)
    w_imag = scale * jax.random.uniform(ki, (C_in, C_out, modes), jnp.float32)

    out = spectral_conv1d_forward(x, w_real, w_imag)
    out = jax.block_until_ready(out)

    ref = spectral_conv1d_reference(x, w_real, w_imag)
    assert out.shape == (B, C_out, N)
    max_err = float(jnp.max(jnp.abs(out - ref)))
    assert jnp.allclose(out, ref, atol=1e-2, rtol=1e-2), (
        f"mismatch vs rfft/irfft reference, max abs err = {max_err}")
    print("KERNEL_OK")
</pallas_src>

<mosaic_0001>
module attributes {stable_mosaic.version = 11 : i64} {
  func.func @_spectral_conv1d_kernel(%arg0: i32, %arg1: memref<4x2x16xf32, #tpu.memory_space<vmem>>, %arg2: memref<16x8xf32, #tpu.memory_space<vmem>>, %arg3: memref<16x8xf32, #tpu.memory_space<vmem>>, %arg4: memref<16x8xf32, #tpu.memory_space<vmem>>, %arg5: memref<16x8xf32, #tpu.memory_space<vmem>>, %arg6: memref<8x16xf32, #tpu.memory_space<vmem>>, %arg7: memref<8x16xf32, #tpu.memory_space<vmem>>, %arg8: memref<4x2x16xf32, #tpu.memory_space<vmem>>) attributes {dimension_semantics = [#tpu.dimension_semantics<parallel>], iteration_bounds = array<i64: 1>, scalar_prefetch = 0 : i64, scratch_operands = 0 : i64, tpu.core_type = #tpu.core_type<tc>, window_params = [{transform_indices = @transform_0, window_bounds = array<i64: 4, 2, 16>}, {pipeline_mode = #tpu.pipeline_mode<synchronous>, transform_indices = @transform_1, window_bounds = array<i64: 16, 8>}, {pipeline_mode = #tpu.pipeline_mode<synchronous>, transform_indices = @transform_2, window_bounds = array<i64: 16, 8>}, {pipeline_mode = #tpu.pipeline_mode<synchronous>, transform_indices = @transform_3, window_bounds = array<i64: 16, 8>}, {pipeline_mode = #tpu.pipeline_mode<synchronous>, transform_indices = @transform_4, window_bounds = array<i64: 16, 8>}, {pipeline_mode = #tpu.pipeline_mode<synchronous>, transform_indices = @transform_5, window_bounds = array<i64: 8, 16>}, {pipeline_mode = #tpu.pipeline_mode<synchronous>, transform_indices = @transform_6, window_bounds = array<i64: 8, 16>}, {transform_indices = @transform_7, window_bounds = array<i64: 4, 2, 16>}]} {
    %c0 = arith.constant 0 : index
    %c0_0 = arith.constant 0 : index
    %0 = vector.load %arg4[%c0, %c0_0] : memref<16x8xf32, #tpu.memory_space<vmem>>, vector<16x8xf32>
    %c0_1 = arith.constant 0 : index
    %c0_2 = arith.constant 0 : index
    %1 = vector.load %arg5[%c0_1, %c0_2] : memref<16x8xf32, #tpu.memory_space<vmem>>, vector<16x8xf32>
    %c0_3 = arith.constant 0 : index
    %c0_4 = arith.constant 0 : index
    %2 = vector.load %arg6[%c0_3, %c0_4] : memref<8x16xf32, #tpu.memory_space<vmem>>, vector<8x16xf32>
    %c0_5 = arith.constant 0 : index
    %c0_6 = arith.constant 0 : index
    %3 = vector.load %arg7[%c0_5, %c0_6] : memref<8x16xf32, #tpu.memory_space<vmem>>, vector<8x16xf32>
    %c0_7 = arith.constant 0 : index
    %c0_8 = arith.constant 0 : index
    %c0_9 = arith.constant 0 : index
    %4 = vector.load %arg1[%c0_7, %c0_8, %c0_9] : memref<4x2x16xf32, #tpu.memory_space<vmem>>, vector<1x2x16xf32>
    %5 = vector.shape_cast %4 : vector<1x2x16xf32> to vector<2x16xf32>
    %cst = arith.constant dense<0.000000e+00> : vector<2x8xf32>
    %6 = tpu.matmul %5, %0, %cst {dimension_numbers = #tpu.dot_dimension_numbers<[1], [0], [0], [1], [0, 0, 1, 1], [], []>} : vector<2x16xf32>, vector<16x8xf32>, vector<2x8xf32> -> vector<2x8xf32>
    %cst_10 = arith.constant dense<0.000000e+00> : vector<2x8xf32>
    %7 = tpu.matmul %5, %1, %cst_10 {dimension_numbers = #tpu.dot_dimension_numbers<[1], [0], [0], [1], [0, 0, 1, 1], [], []>} : vector<2x16xf32>, vector<16x8xf32>, vector<2x8xf32> -> vector<2x8xf32>
    %c1 = arith.constant 1 : index
    %c0_11 = arith.constant 0 : index
    %c0_12 = arith.constant 0 : index
    %8 = vector.load %arg1[%c1, %c0_11, %c0_12] : memref<4x2x16xf32, #tpu.memory_space<vmem>>, vector<1x2x16xf32>
    %9 = vector.shape_cast %8 : vector<1x2x16xf32> to vector<2x16xf32>
    %cst_13 = arith.constant dense<0.000000e+00> : vector<2x8xf32>
    %10 = tpu.matmul %9, %0, %cst_13 {dimension_numbers = #tpu.dot_dimension_numbers<[1], [0], [0], [1], [0, 0, 1, 1], [], []>} : vector<2x16xf32>, vector<16x8xf32>, vector<2x8xf32> -> vector<2x8xf32>
    %cst_14 = arith.constant dense<0.000000e+00> : vector<2x8xf32>
    %11 = tpu.matmul %9, %1, %cst_14 {dimension_numbers = #tpu.dot_dimension_numbers<[1], [0], [0], [1], [0, 0, 1, 1], [], []>} : vector<2x16xf32>, vector<16x8xf32>, vector<2x8xf32> -> vector<2x8xf32>
    %c2 = arith.constant 2 : index
    %c0_15 = arith.constant 0 : index
    %c0_16 = arith.constant 0 : index
    %12 = vector.load %arg1[%c2, %c0_15, %c0_16] : memref<4x2x16xf32, #tpu.memory_space<vmem>>, vector<1x2x16xf32>
    %13 = vector.shape_cast %12 : vector<1x2x16xf32> to vector<2x16xf32>
    %cst_17 = arith.constant dense<0.000000e+00> : vector<2x8xf32>
    %14 = tpu.matmul %13, %0, %cst_17 {dimension_numbers = #tpu.dot_dimension_numbers<[1], [0], [0], [1], [0, 0, 1, 1], [], []>} : vector<2x16xf32>, vector<16x8xf32>, vector<2x8xf32> -> vector<2x8xf32>
    %cst_18 = arith.constant dense<0.000000e+00> : vector<2x8xf32>
    %15 = tpu.matmul %13, %1, %cst_18 {dimension_numbers = #tpu.dot_dimension_numbers<[1], [0], [0], [1], [0, 0, 1, 1], [], []>} : vector<2x16xf32>, vector<16x8xf32>, vector<2x8xf32> -> vector<2x8xf32>
    %c3 = arith.constant 3 : index
    %c0_19 = arith.constant 0 : index
    %c0_20 = arith.constant 0 : index
    %16 = vector.load %arg1[%c3, %c0_19, %c0_20] : memref<4x2x16xf32, #tpu.memory_space<vmem>>, vector<1x2x16xf32>
    %17 = vector.shape_cast %16 : vector<1x2x16xf32> to vector<2x16xf32>
    %cst_21 = arith.constant dense<0.000000e+00> : vector<2x8xf32>
    %18 = tpu.matmul %17, %0, %cst_21 {dimension_numbers = #tpu.dot_dimension_numbers<[1], [0], [0], [1], [0, 0, 1, 1], [], []>} : vector<2x16xf32>, vector<16x8xf32>, vector<2x8xf32> -> vector<2x8xf32>
    %cst_22 = arith.constant dense<0.000000e+00> : vector<2x8xf32>
    %19 = tpu.matmul %17, %1, %cst_22 {dimension_numbers = #tpu.dot_dimension_numbers<[1], [0], [0], [1], [0, 0, 1, 1], [], []>} : vector<2x16xf32>, vector<16x8xf32>, vector<2x8xf32> -> vector<2x8xf32>
    %cst_23 = arith.constant 0.000000e+00 : f32
    %20 = vector.broadcast %cst_23 : f32 to vector<2x8xf32>
    %cst_24 = arith.constant 0.000000e+00 : f32
    %21 = vector.broadcast %cst_24 : f32 to vector<2x8xf32>
    %c0_25 = arith.constant 0 : index
    %c0_26 = arith.constant 0 : index
    %22 = vector.load %arg2[%c0_25, %c0_26] : memref<16x8xf32, #tpu.memory_space<vmem>>, vector<1x8xf32>
    %c0_27 = arith.constant 0 : index
    %c0_28 = arith.constant 0 : index
    %23 = vector.load %arg3[%c0_27, %c0_28] : memref<16x8xf32, #tpu.memory_space<vmem>>, vector<1x8xf32>
    %24 = vector.broadcast %22 : vector<1x8xf32> to vector<2x8xf32>
    %25 = arith.mulf %6, %24 : vector<2x8xf32>
    %26 = arith.addf %20, %25 : vector<2x8xf32>
    %27 = vector.broadcast %23 : vector<1x8xf32> to vector<2x8xf32>
    %28 = arith.mulf %7, %27 : vector<2x8xf32>
    %29 = arith.subf %26, %28 : vector<2x8xf32>
    %30 = vector.broadcast %23 : vector<1x8xf32> to vector<2x8xf32>
    %31 = arith.mulf %6, %30 : vector<2x8xf32>
    %32 = arith.addf %21, %31 : vector<2x8xf32>
    %33 = vector.broadcast %22 : vector<1x8xf32> to vector<2x8xf32>
    %34 = arith.mulf %7, %33 : vector<2x8xf32>
    %35 = arith.addf %32, %34 : vector<2x8xf32>
    %c4 = arith.constant 4 : index
    %c0_29 = arith.constant 0 : index
    %36 = vector.load %arg2[%c4, %c0_29] : memref<16x8xf32, #tpu.memory_space<vmem>>, vector<1x8xf32>
    %c4_30 = arith.constant 4 : index
    %c0_31 = arith.constant 0 : index
    %37 = vector.load %arg3[%c4_30, %c0_31] : memref<16x8xf32, #tpu.memory_space<vmem>>, vector<1x8xf32>
    %38 = vector.broadcast %36 : vector<1x8xf32> to vector<2x8xf32>
    %39 = arith.mulf %10, %38 : vector<2x8xf32>
    %40 = arith.addf %29, %39 : vector<2x8xf32>
    %41 = vector.broadcast %37 : vector<1x8xf32> to vector<2x8xf32>
    %42 = arith.mulf %11, %41 : vector<2x8xf32>
    %43 = arith.subf %40, %42 : vector<2x8xf32>
    %44 = vector.broadcast %37 : vector<1x8xf32> to vector<2x8xf32>
    %45 = arith.mulf %10, %44 : vector<2x8xf32>
    %46 = arith.addf %35, %45 : vector<2x8xf32>
    %47 = vector.broadcast %36 : vector<1x8xf32> to vector<2x8xf32>
    %48 = arith.mulf %11, %47 : vector<2x8xf32>
    %49 = arith.addf %46, %48 : vector<2x8xf32>
    %c8 = arith.constant 8 : index
    %c0_32 = arith.constant 0 : index
    %50 = vector.load %arg2[%c8, %c0_32] : memref<16x8xf32, #tpu.memory_space<vmem>>, vector<1x8xf32>
    %c8_33 = arith.constant 8 : index
    %c0_34 = arith.constant 0 : index
    %51 = vector.load %arg3[%c8_33, %c0_34] : memref<16x8xf32, #tpu.memory_space<vmem>>, vector<1x8xf32>
    %52 = vector.broadcast %50 : vector<1x8xf32> to vector<2x8xf32>
    %53 = arith.mulf %14, %52 : vector<2x8xf32>
    %54 = arith.addf %43, %53 : vector<2x8xf32>
    %55 = vector.broadcast %51 : vector<1x8xf32> to vector<2x8xf32>
    %56 = arith.mulf %15, %55 : vector<2x8xf32>
    %57 = arith.subf %54, %56 : vector<2x8xf32>
    %58 = vector.broadcast %51 : vector<1x8xf32> to vector<2x8xf32>
    %59 = arith.mulf %14, %58 : vector<2x8xf32>
    %60 = arith.addf %49, %59 : vector<2x8xf32>
    %61 = vector.broadcast %50 : vector<1x8xf32> to vector<2x8xf32>
    %62 = arith.mulf %15, %61 : vector<2x8xf32>
    %63 = arith.addf %60, %62 : vector<2x8xf32>
    %c12 = arith.constant 12 : index
    %c0_35 = arith.constant 0 : index
    %64 = vector.load %arg2[%c12, %c0_35] : memref<16x8xf32, #tpu.memory_space<vmem>>, vector<1x8xf32>
    %c12_36 = arith.constant 12 : index
    %c0_37 = arith.constant 0 : index
    %65 = vector.load %arg3[%c12_36, %c0_37] : memref<16x8xf32, #tpu.memory_space<vmem>>, vector<1x8xf32>
    %66 = vector.broadcast %64 : vector<1x8xf32> to vector<2x8xf32>
    %67 = arith.mulf %18, %66 : vector<2x8xf32>
    %68 = arith.addf %57, %67 : vector<2x8xf32>
    %69 = vector.broadcast %65 : vector<1x8xf32> to vector<2x8xf32>
    %70 = arith.mulf %19, %69 : vector<2x8xf32>
    %71 = arith.subf %68, %70 : vector<2x8xf32>
    %72 = vector.broadcast %65 : vector<1x8xf32> to vector<2x8xf32>
    %73 = arith.mulf %18, %72 : vector<2x8xf32>
    %74 = arith.addf %63, %73 : vector<2x8xf32>
    %75 = vector.broadcast %64 : vector<1x8xf32> to vector<2x8xf32>
    %76 = arith.mulf %19, %75 : vector<2x8xf32>
    %77 = arith.addf %74, %76 : vector<2x8xf32>
    %cst_38 = arith.constant dense<0.000000e+00> : vector<2x16xf32>
    %78 = tpu.matmul %71, %2, %cst_38 {dimension_numbers = #tpu.dot_dimension_numbers<[1], [0], [0], [1], [0, 0, 1, 1], [], []>} : vector<2x8xf32>, vector<8x16xf32>, vector<2x16xf32> -> vector<2x16xf32>
    %cst_39 = arith.constant dense<0.000000e+00> : vector<2x16xf32>
    %79 = tpu.matmul %77, %3, %cst_39 {dimension_numbers = #tpu.dot_dimension_numbers<[1], [0], [0], [1], [0, 0, 1, 1], [], []>} : vector<2x8xf32>, vector<8x16xf32>, vector<2x16xf32> -> vector<2x16xf32>
    %80 = arith.addf %78, %79 : vector<2x16xf32>
    %c0_40 = arith.constant 0 : index
    %c0_41 = arith.constant 0 : index
    %c0_42 = arith.constant 0 : index
    %81 = vector.load %arg8[%c0_40, %c0_41, %c0_42] : memref<4x2x16xf32, #tpu.memory_space<vmem>>, vector<1x2x16xf32>
    %82 = vector.shape_cast %81 : vector<1x2x16xf32> to vector<2x16xf32>
    %83 = vector.shape_cast %80 : vector<2x16xf32> to vector<1x2x16xf32>
    tpu.vector_store %arg8[%c0_40, %c0_41, %c0_42], %83 {strides = array<i32>} : memref<4x2x16xf32, #tpu.memory_space<vmem>>, vector<1x2x16xf32>,
    %cst_43 = arith.constant 0.000000e+00 : f32
    %84 = vector.broadcast %cst_43 : f32 to vector<2x8xf32>
    %cst_44 = arith.constant 0.000000e+00 : f32
    %85 = vector.broadcast %cst_44 : f32 to vector<2x8xf32>
    %c1_45 = arith.constant 1 : index
    %c0_46 = arith.constant 0 : index
    %86 = vector.load %arg2[%c1_45, %c0_46] : memref<16x8xf32, #tpu.memory_space<vmem>>, vector<1x8xf32>
    %c1_47 = arith.constant 1 : index
    %c0_48 = arith.constant 0 : index
    %87 = vector.load %arg3[%c1_47, %c0_48] : memref<16x8xf32, #tpu.memory_space<vmem>>, vector<1x8xf32>
    %88 = vector.broadcast %86 : vector<1x8xf32> to vector<2x8xf32>
    %89 = arith.mulf %6, %88 : vector<2x8xf32>
    %90 = arith.addf %84, %89 : vector<2x8xf32>
    %91 = vector.broadcast %87 : vector<1x8xf32> to vector<2x8xf32>
    %92 = arith.mulf %7, %91 : vector<2x8xf32>
    %93 = arith.subf %90, %92 : vector<2x8xf32>
    %94 = vector.broadcast %87 : vector<1x8xf32> to vector<2x8xf32>
    %95 = arith.mulf %6, %94 : vector<2x8xf32>
    %96 = arith.addf %85, %95 : vector<2x8xf32>
    %97 = vector.broadcast %86 : vector<1x8xf32> to vector<2x8xf32>
    %98 = arith.mulf %7, %97 : vector<2x8xf32>
    %99 = arith.addf %96, %98 : vector<2x8xf32>
    %c5 = arith.constant 5 : index
    %c0_49 = arith.constant 0 : index
    %100 = vector.load %arg2[%c5, %c0_49] : memref<16x8xf32, #tpu.memory_space<vmem>>, vector<1x8xf32>
    %c5_50 = arith.constant 5 : index
    %c0_51 = arith.constant 0 : index
    %101 = vector.load %arg3[%c5_50, %c0_51] : memref<16x8xf32, #tpu.memory_space<vmem>>, vector<1x8xf32>
    %102 = vector.broadcast %100 : vector<1x8xf32> to vector<2x8xf32>
    %103 = arith.mulf %10, %102 : vector<2x8xf32>
    %104 = arith.addf %93, %103 : vector<2x8xf32>
    %105 = vector.broadcast %101 : vector<1x8xf32> to vector<2x8xf32>
    %106 = arith.mulf %11, %105 : vector<2x8xf32>
    %107 = arith.subf %104, %106 : vector<2x8xf32>
    %108 = vector.broadcast %101 : vector<1x8xf32> to vector<2x8xf32>
    %109 = arith.mulf %10, %108 : vector<2x8xf32>
    %110 = arith.addf %99, %109 : vector<2x8xf32>
    %111 = vector.broadcast %100 : vector<1x8xf32> to vector<2x8xf32>
    %112 = arith.mulf %11, %111 : vector<2x8xf32>
    %113 = arith.addf %110, %112 : vector<2x8xf32>
    %c9 = arith.constant 9 : index
    %c0_52 = arith.constant 0 : index
    %114 = vector.load %arg2[%c9, %c0_52] : memref<16x8xf32, #tpu.memory_space<vmem>>, vector<1x8xf32>
    %c9_53 = arith.constant 9 : index
    %c0_54 = arith.constant 0 : index
    %115 = vector.load %arg3[%c9_53, %c0_54] : memref<16x8xf32, #tpu.memory_space<vmem>>, vector<1x8xf32>
    %116 = vector.broadcast %114 : vector<1x8xf32> to vector<2x8xf32>
    %117 = arith.mulf %14, %116 : vector<2x8xf32>
    %118 = arith.addf %107, %117 : vector<2x8xf32>
    %119 = vector.broadcast %115 : vector<1x8xf32> to vector<2x8xf32>
    %120 = arith.mulf %15, %119 : vector<2x8xf32>
    %121 = arith.subf %118, %120 : vector<2x8xf32>
    %122 = vector.broadcast %115 : vector<1x8xf32> to vector<2x8xf32>
    %123 = arith.mulf %14, %122 : vector<2x8xf32>
    %124 = arith.addf %113, %123 : vector<2x8xf32>
    %125 = vector.broadcast %114 : vector<1x8xf32> to vector<2x8xf32>
    %126 = arith.mulf %15, %125 : vector<2x8xf32>
    %127 = arith.addf %124, %126 : vector<2x8xf32>
    %c13 = arith.constant 13 : index
    %c0_55 = arith.constant 0 : index
    %128 = vector.load %arg2[%c13, %c0_55] : memref<16x8xf32, #tpu.memory_space<vmem>>, vector<1x8xf32>
    %c13_56 = arith.constant 13 : index
    %c0_57 = arith.constant 0 : index
    %129 = vector.load %arg3[%c13_56, %c0_57] : memref<16x8xf32, #tpu.memory_space<vmem>>, vector<1x8xf32>
    %130 = vector.broadcast %128 : vector<1x8xf32> to vector<2x8xf32>
    %131 = arith.mulf %18, %130 : vector<2x8xf32>
    %132 = arith.addf %121, %131 : vector<2x8xf32>
    %133 = vector.broadcast %129 : vector<1x8xf32> to vector<2x8xf32>
    %134 = arith.mulf %19, %133 : vector<2x8xf32>
    %135 = arith.subf %132, %134 : vector<2x8xf32>
    %136 = vector.broadcast %129 : vector<1x8xf32> to vector<2x8xf32>
    %137 = arith.mulf %18, %136 : vector<2x8xf32>
    %138 = arith.addf %127, %137 : vector<2x8xf32>
    %139 = vector.broadcast %128 : vector<1x8xf32> to vector<2x8xf32>
    %140 = arith.mulf %19, %139 : vector<2x8xf32>
    %141 = arith.addf %138, %140 : vector<2x8xf32>
    %cst_58 = arith.constant dense<0.000000e+00> : vector<2x16xf32>
    %142 = tpu.matmul %135, %2, %cst_58 {dimension_numbers = #tpu.dot_dimension_numbers<[1], [0], [0], [1], [0, 0, 1, 1], [], []>} : vector<2x8xf32>, vector<8x16xf32>, vector<2x16xf32> -> vector<2x16xf32>
    %cst_59 = arith.constant dense<0.000000e+00> : vector<2x16xf32>
    %143 = tpu.matmul %141, %3, %cst_59 {dimension_numbers = #tpu.dot_dimension_numbers<[1], [0], [0], [1], [0, 0, 1, 1], [], []>} : vector<2x8xf32>, vector<8x16xf32>, vector<2x16xf32> -> vector<2x16xf32>
    %144 = arith.addf %142, %143 : vector<2x16xf32>
    %c1_60 = arith.constant 1 : index
    %c0_61 = arith.constant 0 : index
    %c0_62 = arith.constant 0 : index
    %145 = vector.load %arg8[%c1_60, %c0_61, %c0_62] : memref<4x2x16xf32, #tpu.memory_space<vmem>>, vector<1x2x16xf32>
    %146 = vector.shape_cast %145 : vector<1x2x16xf32> to vector<2x16xf32>
    %147 = vector.shape_cast %144 : vector<2x16xf32> to vector<1x2x16xf32>
    tpu.vector_store %arg8[%c1_60, %c0_61, %c0_62], %147 {strides = array<i32>} : memref<4x2x16xf32, #tpu.memory_space<vmem>>, vector<1x2x16xf32>,
    %cst_63 = arith.constant 0.000000e+00 : f32
    %148 = vector.broadcast %cst_63 : f32 to vector<2x8xf32>
    %cst_64 = arith.constant 0.000000e+00 : f32
    %149 = vector.broadcast %cst_64 : f32 to vector<2x8xf32>
    %c2_65 = arith.constant 2 : index
    %c0_66 = arith.constant 0 : index
    %150 = vector.load %arg2[%c2_65, %c0_66] : memref<16x8xf32, #tpu.memory_space<vmem>>, vector<1x8xf32>
    %c2_67 = arith.constant 2 : index
    %c0_68 = arith.constant 0 : index
    %151 = vector.load %arg3[%c2_67, %c0_68] : memref<16x8xf32, #tpu.memory_space<vmem>>, vector<1x8xf32>
    %152 = vector.broadcast %150 : vector<1x8xf32> to vector<2x8xf32>
    %153 = arith.mulf %6, %152 : vector<2x8xf32>
    %154 = arith.addf %148, %153 : vector<2x8xf32>
    %155 = vector.broadcast %151 : vector<1x8xf32> to vector<2x8xf32>
    %156 = arith.mulf %7, %155 : vector<2x8xf32>
    %157 = arith.subf %154, %156 : vector<2x8xf32>
    %158 = vector.broadcast %151 : vector<1x8xf32> to vector<2x8xf32>
    %159 = arith.mulf %6, %158 : vector<2x8xf32>
    %160 = arith.addf %149, %159 : vector<2x8xf32>
    %161 = vector.broadcast %150 : vector<1x8xf32> to vector<2x8xf32>
    %162 = arith.mulf %7, %161 : vector<2x8xf32>
    %163 = arith.addf %160, %162 : vector<2x8xf32>
    %c6 = arith.constant 6 : index
    %c0_69 = arith.constant 0 : index
    %164 = vector.load %arg2[%c6, %c0_69] : memref<16x8xf32, #tpu.memory_space<vmem>>, vector<1x8xf32>
    %c6_70 = arith.constant 6 : index
    %c0_71 = arith.constant 0 : index
    %165 = vector.load %arg3[%c6_70, %c0_71] : memref<16x8xf32, #tpu.memory_space<vmem>>, vector<1x8xf32>
    %166 = vector.broadcast %164 : vector<1x8xf32> to vector<2x8xf32>
    %167 = arith.mulf %10, %166 : vector<2x8xf32>
    %168 = arith.addf %157, %167 : vector<2x8xf32>
    %169 = vector.broadcast %165 : vector<1x8xf32> to vector<2x8xf32>
    %170 = arith.mulf %11, %169 : vector<2x8xf32>
    %171 = arith.subf %168, %170 : vector<2x8xf32>
    %172 = vector.broadcast %165 : vector<1x8xf32> to vector<2x8xf32>
    %173 = arith.mulf %10, %172 : vector<2x8xf32>
    %174 = arith.addf %163, %173 : vector<2x8xf32>
    %175 = vector.broadcast %164 : vector<1x8xf32> to vector<2x8xf32>
    %176 = arith.mulf %11, %175 : vector<2x8xf32>
    %177 = arith.addf %174, %176 : vector<2x8xf32>
    %c10 = arith.constant 10 : index
    %c0_72 = arith.constant 0 : index
    %178 = vector.load %arg2[%c10, %c0_72] : memref<16x8xf32, #tpu.memory_space<vmem>>, vector<1x8xf32>
    %c10_73 = arith.constant 10 : index
    %c0_74 = arith.constant 0 : index
    %179 = vector.load %arg3[%c10_73, %c0_74] : memref<16x8xf32, #tpu.memory_space<vmem>>, vector<1x8xf32>
    %180 = vector.broadcast %178 : vector<1x8xf32> to vector<2x8xf32>
    %181 = arith.mulf %14, %180 : vector<2x8xf32>
    %182 = arith.addf %171, %181 : vector<2x8xf32>
    %183 = vector.broadcast %179 : vector<1x8xf32> to vector<2x8xf32>
    %184 = arith.mulf %15, %183 : vector<2x8xf32>
    %185 = arith.subf %182, %184 : vector<2x8xf32>
    %186 = vector.broadcast %179 : vector<1x8xf32> to vector<2x8xf32>
    %187 = arith.mulf %14, %186 : vector<2x8xf32>
    %188 = arith.addf %177, %187 : vector<2x8xf32>
    %189 = vector.broadcast %178 : vector<1x8xf32> to vector<2x8xf32>
    %190 = arith.mulf %15, %189 : vector<2x8xf32>
    %191 = arith.addf %188, %190 : vector<2x8xf32>
    %c14 = arith.constant 14 : index
    %c0_75 = arith.constant 0 : index
    %192 = vector.load %arg2[%c14, %c0_75] : memref<16x8xf32, #tpu.memory_space<vmem>>, vector<1x8xf32>
    %c14_76 = arith.constant 14 : index
    %c0_77 = arith.constant 0 : index
    %193 = vector.load %arg3[%c14_76, %c0_77] : memref<16x8xf32, #tpu.memory_space<vmem>>, vector<1x8xf32>
    %194 = vector.broadcast %192 : vector<1x8xf32> to vector<2x8xf32>
    %195 = arith.mulf %18, %194 : vector<2x8xf32>
    %196 = arith.addf %185, %195 : vector<2x8xf32>
    %197 = vector.broadcast %193 : vector<1x8xf32> to vector<2x8xf32>
    %198 = arith.mulf %19, %197 : vector<2x8xf32>
    %199 = arith.subf %196, %198 : vector<2x8xf32>
    %200 = vector.broadcast %193 : vector<1x8xf32> to vector<2x8xf32>
    %201 = arith.mulf %18, %200 : vector<2x8xf32>
    %202 = arith.addf %191, %201 : vector<2x8xf32>
    %203 = vector.broadcast %192 : vector<1x8xf32> to vector<2x8xf32>
    %204 = arith.mulf %19, %203 : vector<2x8xf32>
    %205 = arith.addf %202, %204 : vector<2x8xf32>
    %cst_78 = arith.constant dense<0.000000e+00> : vector<2x16xf32>
    %206 = tpu.matmul %199, %2, %cst_78 {dimension_numbers = #tpu.dot_dimension_numbers<[1], [0], [0], [1], [0, 0, 1, 1], [], []>} : vector<2x8xf32>, vector<8x16xf32>, vector<2x16xf32> -> vector<2x16xf32>
    %cst_79 = arith.constant dense<0.000000e+00> : vector<2x16xf32>
    %207 = tpu.matmul %205, %3, %cst_79 {dimension_numbers = #tpu.dot_dimension_numbers<[1], [0], [0], [1], [0, 0, 1, 1], [], []>} : vector<2x8xf32>, vector<8x16xf32>, vector<2x16xf32> -> vector<2x16xf32>
    %208 = arith.addf %206, %207 : vector<2x16xf32>
    %c2_80 = arith.constant 2 : index
    %c0_81 = arith.constant 0 : index
    %c0_82 = arith.constant 0 : index
    %209 = vector.load %arg8[%c2_80, %c0_81, %c0_82] : memref<4x2x16xf32, #tpu.memory_space<vmem>>, vector<1x2x16xf32>
    %210 = vector.shape_cast %209 : vector<1x2x16xf32> to vector<2x16xf32>
    %211 = vector.shape_cast %208 : vector<2x16xf32> to vector<1x2x16xf32>
    tpu.vector_store %arg8[%c2_80, %c0_81, %c0_82], %211 {strides = array<i32>} : memref<4x2x16xf32, #tpu.memory_space<vmem>>, vector<1x2x16xf32>,
    %cst_83 = arith.constant 0.000000e+00 : f32
    %212 = vector.broadcast %cst_83 : f32 to vector<2x8xf32>
    %cst_84 = arith.constant 0.000000e+00 : f32
    %213 = vector.broadcast %cst_84 : f32 to vector<2x8xf32>
    %c3_85 = arith.constant 3 : index
    %c0_86 = arith.constant 0 : index
    %214 = vector.load %arg2[%c3_85, %c0_86] : memref<16x8xf32, #tpu.memory_space<vmem>>, vector<1x8xf32>
    %c3_87 = arith.constant 3 : index
    %c0_88 = arith.constant 0 : index
    %215 = vector.load %arg3[%c3_87, %c0_88] : memref<16x8xf32, #tpu.memory_space<vmem>>, vector<1x8xf32>
    %216 = vector.broadcast %214 : vector<1x8xf32> to vector<2x8xf32>
    %217 = arith.mulf %6, %216 : vector<2x8xf32>
    %218 = arith.addf %212, %217 : vector<2x8xf32>
    %219 = vector.broadcast %215 : vector<1x8xf32> to vector<2x8xf32>
    %220 = arith.mulf %7, %219 : vector<2x8xf32>
    %221 = arith.subf %218, %220 : vector<2x8xf32>
    %222 = vector.broadcast %215 : vector<1x8xf32> to vector<2x8xf32>
    %223 = arith.mulf %6, %222 : vector<2x8xf32>
    %224 = arith.addf %213, %223 : vector<2x8xf32>
    %225 = vector.broadcast %214 : vector<1x8xf32> to vector<2x8xf32>
    %226 = arith.mulf %7, %225 : vector<2x8xf32>
    %227 = arith.addf %224, %226 : vector<2x8xf32>
    %c7 = arith.constant 7 : index
    %c0_89 = arith.constant 0 : index
    %228 = vector.load %arg2[%c7, %c0_89] : memref<16x8xf32, #tpu.memory_space<vmem>>, vector<1x8xf32>
    %c7_90 = arith.constant 7 : index
    %c0_91 = arith.constant 0 : index
    %229 = vector.load %arg3[%c7_90, %c0_91] : memref<16x8xf32, #tpu.memory_space<vmem>>, vector<1x8xf32>
    %230 = vector.broadcast %228 : vector<1x8xf32> to vector<2x8xf32>
    %231 = arith.mulf %10, %230 : vector<2x8xf32>
    %232 = arith.addf %221, %231 : vector<2x8xf32>
    %233 = vector.broadcast %229 : vector<1x8xf32> to vector<2x8xf32>
    %234 = arith.mulf %11, %233 : vector<2x8xf32>
    %235 = arith.subf %232, %234 : vector<2x8xf32>
    %236 = vector.broadcast %229 : vector<1x8xf32> to vector<2x8xf32>
    %237 = arith.mulf %10, %236 : vector<2x8xf32>
    %238 = arith.addf %227, %237 : vector<2x8xf32>
    %239 = vector.broadcast %228 : vector<1x8xf32> to vector<2x8xf32>
    %240 = arith.mulf %11, %239 : vector<2x8xf32>
    %241 = arith.addf %238, %240 : vector<2x8xf32>
    %c11 = arith.constant 11 : index
    %c0_92 = arith.constant 0 : index
    %242 = vector.load %arg2[%c11, %c0_92] : memref<16x8xf32, #tpu.memory_space<vmem>>, vector<1x8xf32>
    %c11_93 = arith.constant 11 : index
    %c0_94 = arith.constant 0 : index
    %243 = vector.load %arg3[%c11_93, %c0_94] : memref<16x8xf32, #tpu.memory_space<vmem>>, vector<1x8xf32>
    %244 = vector.broadcast %242 : vector<1x8xf32> to vector<2x8xf32>
    %245 = arith.mulf %14, %244 : vector<2x8xf32>
    %246 = arith.addf %235, %245 : vector<2x8xf32>
    %247 = vector.broadcast %243 : vector<1x8xf32> to vector<2x8xf32>
    %248 = arith.mulf %15, %247 : vector<2x8xf32>
    %249 = arith.subf %246, %248 : vector<2x8xf32>
    %250 = vector.broadcast %243 : vector<1x8xf32> to vector<2x8xf32>
    %251 = arith.mulf %14, %250 : vector<2x8xf32>
    %252 = arith.addf %241, %251 : vector<2x8xf32>
    %253 = vector.broadcast %242 : vector<1x8xf32> to vector<2x8xf32>
    %254 = arith.mulf %15, %253 : vector<2x8xf32>
    %255 = arith.addf %252, %254 : vector<2x8xf32>
    %c15 = arith.constant 15 : index
    %c0_95 = arith.constant 0 : index
    %256 = vector.load %arg2[%c15, %c0_95] : memref<16x8xf32, #tpu.memory_space<vmem>>, vector<1x8xf32>
    %c15_96 = arith.constant 15 : index
    %c0_97 = arith.constant 0 : index
    %257 = vector.load %arg3[%c15_96, %c0_97] : memref<16x8xf32, #tpu.memory_space<vmem>>, vector<1x8xf32>
    %258 = vector.broadcast %256 : vector<1x8xf32> to vector<2x8xf32>
    %259 = arith.mulf %18, %258 : vector<2x8xf32>
    %260 = arith.addf %249, %259 : vector<2x8xf32>
    %261 = vector.broadcast %257 : vector<1x8xf32> to vector<2x8xf32>
    %262 = arith.mulf %19, %261 : vector<2x8xf32>
    %263 = arith.subf %260, %262 : vector<2x8xf32>
    %264 = vector.broadcast %257 : vector<1x8xf32> to vector<2x8xf32>
    %265 = arith.mulf %18, %264 : vector<2x8xf32>
    %266 = arith.addf %255, %265 : vector<2x8xf32>
    %267 = vector.broadcast %256 : vector<1x8xf32> to vector<2x8xf32>
    %268 = arith.mulf %19, %267 : vector<2x8xf32>
    %269 = arith.addf %266, %268 : vector<2x8xf32>
    %cst_98 = arith.constant dense<0.000000e+00> : vector<2x16xf32>
    %270 = tpu.matmul %263, %2, %cst_98 {dimension_numbers = #tpu.dot_dimension_numbers<[1], [0], [0], [1], [0, 0, 1, 1], [], []>} : vector<2x8xf32>, vector<8x16xf32>, vector<2x16xf32> -> vector<2x16xf32>
    %cst_99 = arith.constant dense<0.000000e+00> : vector<2x16xf32>
    %271 = tpu.matmul %269, %3, %cst_99 {dimension_numbers = #tpu.dot_dimension_numbers<[1], [0], [0], [1], [0, 0, 1, 1], [], []>} : vector<2x8xf32>, vector<8x16xf32>, vector<2x16xf32> -> vector<2x16xf32>
    %272 = arith.addf %270, %271 : vector<2x16xf32>
    %c3_100 = arith.constant 3 : index
    %c0_101 = arith.constant 0 : index
    %c0_102 = arith.constant 0 : index
    %273 = vector.load %arg8[%c3_100, %c0_101, %c0_102] : memref<4x2x16xf32, #tpu.memory_space<vmem>>, vector<1x2x16xf32>
    %274 = vector.shape_cast %273 : vector<1x2x16xf32> to vector<2x16xf32>
    %275 = vector.shape_cast %272 : vector<2x16xf32> to vector<1x2x16xf32>
    tpu.vector_store %arg8[%c3_100, %c0_101, %c0_102], %275 {strides = array<i32>} : memref<4x2x16xf32, #tpu.memory_space<vmem>>, vector<1x2x16xf32>,
    return
  }
  func.func @transform_0(%arg0: i32) -> (i32, i32, i32) {
    %c0_i32 = arith.constant 0 : i32
    %c0_i32_0 = arith.constant 0 : i32
    %c0_i32_1 = arith.constant 0 : i32
    return %c0_i32, %arg0, %c0_i32_0 : i32, i32, i32
  }
  func.func @transform_1(%arg0: i32) -> (i32, i32) {
    %c0_i32 = arith.constant 0 : i32
    %c0_i32_0 = arith.constant 0 : i32
    %c0_i32_1 = arith.constant 0 : i32
    return %c0_i32, %c0_i32_0 : i32, i32
  }
  func.func @transform_2(%arg0: i32) -> (i32, i32) {
    %c0_i32 = arith.constant 0 : i32
    %c0_i32_0 = arith.constant 0 : i32
    %c0_i32_1 = arith.constant 0 : i32
    return %c0_i32, %c0_i32_0 : i32, i32
  }
  func.func @transform_3(%arg0: i32) -> (i32, i32) {
    %c0_i32 = arith.constant 0 : i32
    %c0_i32_0 = arith.constant 0 : i32
    %c0_i32_1 = arith.constant 0 : i32
    return %c0_i32, %c0_i32_0 : i32, i32
  }
  func.func @transform_4(%arg0: i32) -> (i32, i32) {
    %c0_i32 = arith.constant 0 : i32
    %c0_i32_0 = arith.constant 0 : i32
    %c0_i32_1 = arith.constant 0 : i32
    return %c0_i32, %c0_i32_0 : i32, i32
  }
  func.func @transform_5(%arg0: i32) -> (i32, i32) {
    %c0_i32 = arith.constant 0 : i32
    %c0_i32_0 = arith.constant 0 : i32
    %c0_i32_1 = arith.constant 0 : i32
    return %c0_i32, %c0_i32_0 : i32, i32
  }
  func.func @transform_6(%arg0: i32) -> (i32, i32) {
    %c0_i32 = arith.constant 0 : i32
    %c0_i32_0 = arith.constant 0 : i32
    %c0_i32_1 = arith.constant 0 : i32
    return %c0_i32, %c0_i32_0 : i32, i32
  }
  func.func @transform_7(%arg0: i32) -> (i32, i32, i32) {
    %c0_i32 = arith.constant 0 : i32
    %c0_i32_0 = arith.constant 0 : i32
    %c0_i32_1 = arith.constant 0 : i32
    return %c0_i32, %arg0, %c0_i32_0 : i32, i32, i32
  }
}

</mosaic_0001>

<llo_original>
// kernel: tpu_custom_call.1
$region0: #{tpu_custom_call.1}
  #allocation0 [shape = 'u32[]', space=smem, size = 0x4, offset = 0x4, fixed_abs, tag = 'smem constant byte address 0x4 - core index']
  #allocation1 [shape = 'u32[144,128]{1,0:T(1,128)}', space=vmem, size = 0x12000, scoped, tag = 'internal scratch']
  %s0 = inlined_call_operand.vmem [shape: f32[4,2,16], index: 0, kind: input, shape index: {}]
  %s1 = inlined_call_operand.vmem [shape: f32[16,8], index: 1, kind: input, shape index: {}]
  %s2 = inlined_call_operand.vmem [shape: f32[16,8], index: 2, kind: input, shape index: {}]
  %s3 = inlined_call_operand.vmem [shape: f32[16,8], index: 3, kind: input, shape index: {}]
  %s4 = inlined_call_operand.vmem [shape: f32[16,8], index: 4, kind: input, shape index: {}]
  %s5 = inlined_call_operand.vmem [shape: f32[8,16], index: 5, kind: input, shape index: {}]
  %s6 = inlined_call_operand.vmem [shape: f32[8,16], index: 6, kind: input, shape index: {}]
  %s7 = inlined_call_operand.hbm [shape: f32[4,2,16], index: 7, kind: output, shape index: {}]
  %s8 = sld [smem:[#allocation0]]
  $region38: #{tpu_custom_call.1} parent=0
    _
  %s10 = ssub.s32 1, %s8
  %s11 = scalar_select 0, %s10, %s8
  $region1: #{tpu_custom_call.1} parent=0
    #allocation2 [shape = 'u8[4096]{0}', space=vmem, size = 0x1000, scoped, tag = 'output window, operand 0, single buffered']
    #allocation3 [shape = 's32[1]{0}', space=sflag, size = 0x4, scoped, tag = 'scoped memory for tpu_custom_call.1']
    %12 = vsyncpa [#allocation3], 0
    // Predicated region
    $region2: #{tpu_custom_call.1} parent=1 // pred_check
      _
    $region3: #{tpu_custom_call.1} parent=1 // pred_check_branch
      %14 = sbr.rel (0) target = $region5
    $region4: #{tpu_custom_call.1} parent=1 // pred_region
      _
    $region5: #{tpu_custom_call.1} parent=1 // pred_fallthru
      _
    // Predicated region
    $region6: #{tpu_custom_call.1} parent=1 // pred_check
      _
    $region7: #{tpu_custom_call.1} parent=1 // pred_check_branch
      %16 = sbr.rel (0) target = $region9
    $region8: #{tpu_custom_call.1} parent=1 // pred_region
      _
    $region9: #{tpu_custom_call.1} parent=1 // pred_fallthru
      _
    // Predicated region
    $region10: #{tpu_custom_call.1} parent=1 // pred_check
      _
    $region11: #{tpu_custom_call.1} parent=1 // pred_check_branch
      %18 = sbr.rel (0) target = $region13
    $region12: #{tpu_custom_call.1} parent=1 // pred_region
      _
    $region13: #{tpu_custom_call.1} parent=1 // pred_fallthru
      _
    // Predicated region
    $region14: #{tpu_custom_call.1} parent=1 // pred_check
      _
    $region15: #{tpu_custom_call.1} parent=1 // pred_check_branch
      %20 = sbr.rel (0) target = $region17
    $region16: #{tpu_custom_call.1} parent=1 // pred_region
      _
    $region17: #{tpu_custom_call.1} parent=1 // pred_fallthru
      _
    // Predicated region
    $region18: #{tpu_custom_call.1} parent=1 // pred_check
      _
    $region19: #{tpu_custom_call.1} parent=1 // pred_check_branch
      %22 = sbr.rel (0) target = $region21
    $region20: #{tpu_custom_call.1} parent=1 // pred_region
      _
    $region21: #{tpu_custom_call.1} parent=1 // pred_fallthru
      _
    // Predicated region
    $region22: #{tpu_custom_call.1} parent=1 // pred_check
      _
    $region23: #{tpu_custom_call.1} parent=1 // pred_check_branch
      %24 = sbr.rel (0) target = $region25
    $region24: #{tpu_custom_call.1} parent=1 // pred_region
      _
    $region25: #{tpu_custom_call.1} parent=1 // pred_fallthru
      _
    // Predicated region
    $region26: #{tpu_custom_call.1} parent=1 // pred_check
      _
    $region27: #{tpu_custom_call.1} parent=1 // pred_check_branch
      %26 = sbr.rel (0) target = $region29
    $region28: #{tpu_custom_call.1} parent=1 // pred_region
      _
    $region29: #{tpu_custom_call.1} parent=1 // pred_fallthru
      _
    %v27 = vld [vmem:[%s3] sm:$0xff]
    %v28 = vld [vmem:[%s3 + $0x8] sm:$0xff]
    %v29 = vld [vmem:[%s4] sm:$0xff]
    %v30 = vld [vmem:[%s4 + $0x8] sm:$0xff]
    %v31 = vld [vmem:[%s5] sm:$0xff]
    %v32 = vld [vmem:[%s6] sm:$0xff]
    %v33 = vld [vmem:[%s0] sm:$0x3]
    %vm34 = vcmask 130048
    %v36 = vsel %vm34, %v33, 0
    %38 = vmatprep.subr.mxu0 0.0
    %39 = vmatpush1.msra.mxu0 %v27
    %40 = vmatprep.subr.mxu0 0.0
    %41 = vmatpush1.msra.mxu0 %v28
    %42 = vmatprep.subr.mxu0 0.0
    %43 = vmatpush1.msra.mxu0 0.0
    %44 = vmatprep.subr.mxu0 0.0
    %45 = vmatpush1.msra.mxu0 0.0
    %46 = vmatprep.subr.mxu0 0.0
    %47 = vmatpush1.msra.mxu0 0.0
    %48 = vmatprep.subr.mxu0 0.0
    %49 = vmatpush1.msra.mxu0 0.0
    %50 = vmatprep.subr.mxu0 0.0
    %51 = vmatpush1.msra.mxu0 0.0
    %52 = vmatprep.subr.mxu0 0.0
    %53 = vmatpush1.msra.mxu0 0.0
    %54 = vmatprep.subr.mxu0 0.0
    %55 = vmatpush1.msra.mxu0 0.0
    %56 = vmatprep.subr.mxu0 0.0
    %57 = vmatpush1.msra.mxu0 0.0
    %58 = vmatprep.subr.mxu0 0.0
    %59 = vmatpush1.msra.mxu0 0.0
    %60 = vmatprep.subr.mxu0 0.0
    %61 = vmatpush1.msra.mxu0 0.0
    %62 = vmatprep.subr.mxu0 0.0
    %63 = vmatpush1.msra.mxu0 0.0
    %64 = vmatprep.subr.mxu0 0.0
    %65 = vmatpush1.msra.mxu0 0.0
    %66 = vmatprep.subr.mxu0 0.0
    %67 = vmatpush1.msra.mxu0 0.0
    %68 = vmatprep.subr.mxu0 0.0
    %69 = vmatpush1.msra.mxu0 0.0
    %70 = vmatprep.subr.mxu0 0.0
    %71 = vmatpush1.msra.mxu0 0.0
    %72 = vmatprep.subr.mxu0 0.0
    %73 = vmatpush1.msra.mxu0 0.0
    %74 = vmatprep.subr.mxu0 0.0
    %75 = vmatpush1.msra.mxu0 0.0
    %76 = vmatprep.subr.mxu0 0.0
    %77 = vmatpush1.msra.mxu0 0.0
    %78 = vmatprep.subr.mxu0 0.0
    %79 = vmatpush1.msra.mxu0 0.0
    %80 = vmatprep.subr.mxu0 0.0
    %81 = vmatpush1.msra.mxu0 0.0
    %82 = vmatprep.subr.mxu0 0.0
    %83 = vmatpush1.msra.mxu0 0.0
    %84 = vmatprep.subr.mxu0 0.0
    %85 = vmatpush1.msra.mxu0 0.0
    %86 = vmatprep.subr.mxu0 0.0
    %87 = vmatpush1.msra.mxu0 0.0
    %88 = vmatprep.subr.mxu0 0.0
    %89 = vmatpush1.msra.mxu0 0.0
    %90 = vmatprep.subr.mxu0 0.0
    %91 = vmatpush1.msra.mxu0 0.0
    %92 = vmatprep.subr.mxu0 0.0
    %93 = vmatpush1.msra.mxu0 0.0
    %94 = vmatprep.subr.mxu0 0.0
    %95 = vmatpush1.msra.mxu0 0.0
    %96 = vmatprep.subr.mxu0 0.0
    %97 = vmatpush1.msra.mxu0 0.0
    %98 = vmatprep.subr.mxu0 0.0
    %99 = vmatpush1.msra.mxu0 0.0
    %100 = vmatprep.subr.mxu0 0.0
    %101 = vmatpush1.msra.mxu0 0.0
    %102 = vmatprep.mubr.f32.mxu0 0.0
    %103 = vmatmul.mubr.f32.gmra.mrb[0].mxu0 %v36
    %v104 = vpop.f32.mrb[0].mxu0
    %v105 = vadd.f32 0.0, %v104
    %v106 = vpop.f32.mrb[0].mxu0
    %107 = vdwg.mxu0
    %108 = vmatprep.subr.mxu0 0.0
    %109 = vmatpush1.msra.mxu0 %v29
    %110 = vmatprep.subr.mxu0 0.0
    %111 = vmatpush1.msra.mxu0 %v30
    %112 = vmatprep.subr.mxu0 0.0
    %113 = vmatpush1.msra.mxu0 0.0
    %114 = vmatprep.subr.mxu0 0.0
    %115 = vmatpush1.msra.mxu0 0.0
    %116 = vmatprep.subr.mxu0 0.0
    %117 = vmatpush1.msra.mxu0 0.0
    %118 = vmatprep.subr.mxu0 0.0
    %119 = vmatpush1.msra.mxu0 0.0
    %120 = vmatprep.subr.mxu0 0.0
    %121 = vmatpush1.msra.mxu0 0.0
    %122 = vmatprep.subr.mxu0 0.0
    %123 = vmatpush1.msra.mxu0 0.0
    %124 = vmatprep.subr.mxu0 0.0
    %125 = vmatpush1.msra.mxu0 0.0
    %126 = vmatprep.subr.mxu0 0.0
    %127 = vmatpush1.msra.mxu0 0.0
    %128 = vmatprep.subr.mxu0 0.0
    %129 = vmatpush1.msra.mxu0 0.0
    %130 = vmatprep.subr.mxu0 0.0
    %131 = vmatpush1.msra.mxu0 0.0
    %132 = vmatprep.subr.mxu0 0.0
    %133 = vmatpush1.msra.mxu0 0.0
    %134 = vmatprep.subr.mxu0 0.0
    %135 = vmatpush1.msra.mxu0 0.0
    %136 = vmatprep.subr.mxu0 0.0
    %137 = vmatpush1.msra.mxu0 0.0
    %138 = vmatprep.subr.mxu0 0.0
    %139 = vmatpush1.msra.mxu0 0.0
    %140 = vmatprep.subr.mxu0 0.0
    %141 = vmatpush1.msra.mxu0 0.0
    %142 = vmatprep.subr.mxu0 0.0
    %143 = vmatpush1.msra.mxu0 0.0
    %144 = vmatprep.subr.mxu0 0.0
    %145 = vmatpush1.msra.mxu0 0.0
    %146 = vmatprep.subr.mxu0 0.0
    %147 = vmatpush1.msra.mxu0 0.0
    %148 = vmatprep.subr.mxu0 0.0
    %149 = vmatpush1.msra.mxu0 0.0
    %150 = vmatprep.subr.mxu0 0.0
    %151 = vmatpush1.msra.mxu0 0.0
    %152 = vmatprep.subr.mxu0 0.0
    %153 = vmatpush1.msra.mxu0 0.0
    %154 = vmatprep.subr.mxu0 0.0
    %155 = vmatpush1.msra.mxu0 0.0
    %156 = vmatprep.subr.mxu0 0.0
    %157 = vmatpush1.msra.mxu0 0.0
    %158 = vmatprep.subr.mxu0 0.0
    %159 = vmatpush1.msra.mxu0 0.0
    %160 = vmatprep.subr.mxu0 0.0
    %161 = vmatpush1.msra.mxu0 0.0
    %162 = vmatprep.subr.mxu0 0.0
    %163 = vmatpush1.msra.mxu0 0.0
    %164 = vmatprep.subr.mxu0 0.0
    %165 = vmatpush1.msra.mxu0 0.0
    %166 = vmatprep.subr.mxu0 0.0
    %167 = vmatpush1.msra.mxu0 0.0
    %168 = vmatprep.subr.mxu0 0.0
    %169 = vmatpush1.msra.mxu0 0.0
    %170 = vmatprep.subr.mxu0 0.0
    %171 = vmatpush1.msra.mxu0 0.0
    %172 = vmatprep.mubr.f32.mxu0 0.0
    %173 = vmatmul.mubr.f32.gmra.mrb[0].mxu0 %v36
    %v174 = vpop.f32.mrb[0].mxu0
    %v175 = vadd.f32 0.0, %v174
    %v176 = vpop.f32.mrb[0].mxu0
    %177 = vdwg.mxu0
    %s178 = scalar_lea.vmem %s0, 2
    %v179 = vld [vmem:[%s178] sm:$0x3]
    %v181 = vsel %vm34, %v179, 0
    %183 = vmatprep.subr.mxu0 0.0
    %184 = vmatpush1.msra.mxu0 %v27
    %185 = vmatprep.subr.mxu0 0.0
    %186 = vmatpush1.msra.mxu0 %v28
    %187 = vmatprep.subr.mxu0 0.0
    %188 = vmatpush1.msra.mxu0 0.0
    %189 = vmatprep.subr.mxu0 0.0
    %190 = vmatpush1.msra.mxu0 0.0
    %191 = vmatprep.subr.mxu0 0.0
    %192 = vmatpush1.msra.mxu0 0.0
    %193 = vmatprep.subr.mxu0 0.0
    %194 = vmatpush1.msra.mxu0 0.0
    %195 = vmatprep.subr.mxu0 0.0
    %196 = vmatpush1.msra.mxu0 0.0
    %197 = vmatprep.subr.mxu0 0.0
    %198 = vmatpush1.msra.mxu0 0.0
    %199 = vmatprep.subr.mxu0 0.0
    %200 = vmatpush1.msra.mxu0 0.0
    %201 = vmatprep.subr.mxu0 0.0
    %202 = vmatpush1.msra.mxu0 0.0
    %203 = vmatprep.subr.mxu0 0.0
    %204 = vmatpush1.msra.mxu0 0.0
    %205 = vmatprep.subr.mxu0 0.0
    %206 = vmatpush1.msra.mxu0 0.0
    %207 = vmatprep.subr.mxu0 0.0
    %208 = vmatpush1.msra.mxu0 0.0
    %209 = vmatprep.subr.mxu0 0.0
    %210 = vmatpush1.msra.mxu0 0.0
    %211 = vmatprep.subr.mxu0 0.0
    %212 = vmatpush1.msra.mxu0 0.0
    %213 = vmatprep.subr.mxu0 0.0
    %214 = vmatpush1.msra.mxu0 0.0
    %215 = vmatprep.subr.mxu0 0.0
    %216 = vmatpush1.msra.mxu0 0.0
    %217 = vmatprep.subr.mxu0 0.0
    %218 = vmatpush1.msra.mxu0 0.0
    %219 = vmatprep.subr.mxu0 0.0
    %220 = vmatpush1.msra.mxu0 0.0
    %221 = vmatprep.subr.mxu0 0.0
    %222 = vmatpush1.msra.mxu0 0.0
    %223 = vmatprep.subr.mxu0 0.0
    %224 = vmatpush1.msra.mxu0 0.0
    %225 = vmatprep.subr.mxu0 0.0
    %226 = vmatpush1.msra.mxu0 0.0
    %227 = vmatprep.subr.mxu0 0.0
    %228 = vmatpush1.msra.mxu0 0.0
    %229 = vmatprep.subr.mxu0 0.0
    %230 = vmatpush1.msra.mxu0 0.0
    %231 = vmatprep.subr.mxu0 0.0
    %232 = vmatpush1.msra.mxu0 0.0
    %233 = vmatprep.subr.mxu0 0.0
    %234 = vmatpush1.msra.mxu0 0.0
    %235 = vmatprep.subr.mxu0 0.0
    %236 = vmatpush1.msra.mxu0 0.0
    %237 = vmatprep.subr.mxu0 0.0
    %238 = vmatpush1.msra.mxu0 0.0
    %239 = vmatprep.subr.mxu0 0.0
    %240 = vmatpush1.msra.mxu0 0.0
    %241 = vmatprep.subr.mxu0 0.0
    %242 = vmatpush1.msra.mxu0 0.0
    %243 = vmatprep.subr.mxu0 0.0
    %244 = vmatpush1.msra.mxu0 0.0
    %245 = vmatprep.subr.mxu0 0.0
    %246 = vmatpush1.msra.mxu0 0.0
    %247 = vmatprep.mubr.f32.mxu0 0.0
    %248 = vmatmul.mubr.f32.gmra.mrb[0].mxu0 %v181
    %v249 = vpop.f32.mrb[0].mxu0
    %v250 = vadd.f32 0.0, %v249
    %v251 = vpop.f32.mrb[0].mxu0
    %252 = vdwg.mxu0
    %253 = vmatprep.subr.mxu0 0.0
    %254 = vmatpush1.msra.mxu0 %v29
    %255 = vmatprep.subr.mxu0 0.0
    %256 = vmatpush1.msra.mxu0 %v30
    %257 = vmatprep.subr.mxu0 0.0
    %258 = vmatpush1.msra.mxu0 0.0
    %259 = vmatprep.subr.mxu0 0.0
    %260 = vmatpush1.msra.mxu0 0.0
    %261 = vmatprep.subr.mxu0 0.0
    %262 = vmatpush1.msra.mxu0 0.0
    %263 = vmatprep.subr.mxu0 0.0
    %264 = vmatpush1.msra.mxu0 0.0
    %265 = vmatprep.subr.mxu0 0.0
    %266 = vmatpush1.msra.mxu0 0.0
    %267 = vmatprep.subr.mxu0 0.0
    %268 = vmatpush1.msra.mxu0 0.0
    %269 = vmatprep.subr.mxu0 0.0
    %270 = vmatpush1.msra.mxu0 0.0
    %271 = vmatprep.subr.mxu0 0.0
    %272 = vmatpush1.msra.mxu0 0.0
    %273 = vmatprep.subr.mxu0 0.0
    %274 = vmatpush1.msra.mxu0 0.0
    %275 = vmatprep.subr.mxu0 0.0
    %276 = vmatpush1.msra.mxu0 0.0
    %277 = vmatprep.subr.mxu0 0.0
    %278 = vmatpush1.msra.mxu0 0.0
    %279 = vmatprep.subr.mxu0 0.0
    %280 = vmatpush1.msra.mxu0 0.0
    %281 = vmatprep.subr.mxu0 0.0
    %282 = vmatpush1.msra.mxu0 0.0
    %283 = vmatprep.subr.mxu0 0.0
    %284 = vmatpush1.msra.mxu0 0.0
    %285 = vmatprep.subr.mxu0 0.0
    %286 = vmatpush1.msra.mxu0 0.0
    %287 = vmatprep.subr.mxu0 0.0
    %288 = vmatpush1.msra.mxu0 0.0
    %289 = vmatprep.subr.mxu0 0.0
    %290 = vmatpush1.msra.mxu0 0.0
    %291 = vmatprep.subr.mxu0 0.0
    %292 = vmatpush1.msra.mxu0 0.0
    %293 = vmatprep.subr.mxu0 0.0
    %294 = vmatpush1.msra.mxu0 0.0
    %295 = vmatprep.subr.mxu0 0.0
    %296 = vmatpush1.msra.mxu0 0.0
    %297 = vmatprep.subr.mxu0 0.0
    %298 = vmatpush1.msra.mxu0 0.0
    %299 = vmatprep.subr.mxu0 0.0
    %300 = vmatpush1.msra.mxu0 0.0
    %301 = vmatprep.subr.mxu0 0.0
    %302 = vmatpush1.msra.mxu0 0.0
    %303 = vmatprep.subr.mxu0 0.0
    %304 = vmatpush1.msra.mxu0 0.0
    %305 = vmatprep.subr.mxu0 0.0
    %306 = vmatpush1.msra.mxu0 0.0
    %307 = vmatprep.subr.mxu0 0.0
    %308 = vmatpush1.msra.mxu0 0.0
    %309 = vmatprep.subr.mxu0 0.0
    %310 = vmatpush1.msra.mxu0 0.0
    %311 = vmatprep.subr.mxu0 0.0
    %312 = vmatpush1.msra.mxu0 0.0
    %313 = vmatprep.subr.mxu0 0.0
    %314 = vmatpush1.msra.mxu0 0.0
    %315 = vmatprep.subr.mxu0 0.0
    %316 = vmatpush1.msra.mxu0 0.0
    %317 = vmatprep.mubr.f32.mxu0 0.0
    %318 = vmatmul.mubr.f32.gmra.mrb[0].mxu0 %v181
    %v319 = vpop.f32.mrb[0].mxu0
    %v320 = vadd.f32 0.0, %v319
    %v321 = vpop.f32.mrb[0].mxu0
    %322 = vdwg.mxu0
    %s323 = scalar_lea.vmem %s0, 4
    %v324 = vld [vmem:[%s323] sm:$0x3]
    %v326 = vsel %vm34, %v324, 0
    %328 = vmatprep.subr.mxu0 0.0
    %329 = vmatpush1.msra.mxu0 %v27
    %330 = vmatprep.subr.mxu0 0.0
    %331 = vmatpush1.msra.mxu0 %v28
    %332 = vmatprep.subr.mxu0 0.0
    %333 = vmatpush1.msra.mxu0 0.0
    %334 = vmatprep.subr.mxu0 0.0
    %335 = vmatpush1.msra.mxu0 0.0
    %336 = vmatprep.subr.mxu0 0.0
    %337 = vmatpush1.msra.mxu0 0.0
    %338 = vmatprep.subr.mxu0 0.0
    %339 = vmatpush1.msra.mxu0 0.0
    %340 = vmatprep.subr.mxu0 0.0
    %341 = vmatpush1.msra.mxu0 0.0
    %342 = vmatprep.subr.mxu0 0.0
    %343 = vmatpush1.msra.mxu0 0.0
    %344 = vmatprep.subr.mxu0 0.0
    %345 = vmatpush1.msra.mxu0 0.0
    %346 = vmatprep.subr.mxu0 0.0
    %347 = vmatpush1.msra.mxu0 0.0
    %348 = vmatprep.subr.mxu0 0.0
    %349 = vmatpush1.msra.mxu0 0.0
    %350 = vmatprep.subr.mxu0 0.0
    %351 = vmatpush1.msra.mxu0 0.0
    %352 = vmatprep.subr.mxu0 0.0
    %353 = vmatpush1.msra.mxu0 0.0
    %354 = vmatprep.subr.mxu0 0.0
    %355 = vmatpush1.msra.mxu0 0.0
    %356 = vmatprep.subr.mxu0 0.0
    %357 = vmatpush1.msra.mxu0 0.0
    %358 = vmatprep.subr.mxu0 0.0
    %359 = vmatpush1.msra.mxu0 0.0
    %360 = vmatprep.subr.mxu0 0.0
    %361 = vmatpush1.msra.mxu0 0.0
    %362 = vmatprep.subr.mxu0 0.0
    %363 = vmatpush1.msra.mxu0 0.0
    %364 = vmatprep.subr.mxu0 0.0
    %365 = vmatpush1.msra.mxu0 0.0
    %366 = vmatprep.subr.mxu0 0.0
    %367 = vmatpush1.msra.mxu0 0.0
    %368 = vmatprep.subr.mxu0 0.0
    %369 = vmatpush1.msra.mxu0 0.0
    %370 = vmatprep.subr.mxu0 0.0
    %371 = vmatpush1.msra.mxu0 0.0
    %372 = vmatprep.subr.mxu0 0.0
    %373 = vmatpush1.msra.mxu0 0.0
    %374 = vmatprep.subr.mxu0 0.0
    %375 = vmatpush1.msra.mxu0 0.0
    %376 = vmatprep.subr.mxu0 0.0
    %377 = vmatpush1.msra.mxu0 0.0
    %378 = vmatprep.subr.mxu0 0.0
    %379 = vmatpush1.msra.mxu0 0.0
    %380 = vmatprep.subr.mxu0 0.0
    %381 = vmatpush1.msra.mxu0 0.0
    %382 = vmatprep.subr.mxu0 0.0
    %383 = vmatpush1.msra.mxu0 0.0
    %384 = vmatprep.subr.mxu0 0.0
    %385 = vmatpush1.msra.mxu0 0.0
    %386 = vmatprep.subr.mxu0 0.0
    %387 = vmatpush1.msra.mxu0 0.0
    %388 = vmatprep.subr.mxu0 0.0
    %389 = vmatpush1.msra.mxu0 0.0
    %390 = vmatprep.subr.mxu0 0.0
    %391 = vmatpush1.msra.mxu0 0.0
    %392 = vmatprep.mubr.f32.mxu0 0.0
    %393 = vmatmul.mubr.f32.gmra.mrb[0].mxu0 %v326
    %v394 = vpop.f32.mrb[0].mxu0
    %v395 = vadd.f32 0.0, %v394
    %v396 = vpop.f32.mrb[0].mxu0
    %397 = vdwg.mxu0
    %398 = vmatprep.subr.mxu0 0.0
    %399 = vmatpush1.msra.mxu0 %v29
    %400 = vmatprep.subr.mxu0 0.0
    %401 = vmatpush1.msra.mxu0 %v30
    %402 = vmatprep.subr.mxu0 0.0
    %403 = vmatpush1.msra.mxu0 0.0
    %404 = vmatprep.subr.mxu0 0.0
    %405 = vmatpush1.msra.mxu0 0.0
    %406 = vmatprep.subr.mxu0 0.0
    %407 = vmatpush1.msra.mxu0 0.0
    %408 = vmatprep.subr.mxu0 0.0
    %409 = vmatpush1.msra.mxu0 0.0
    %410 = vmatprep.subr.mxu0 0.0
    %411 = vmatpush1.msra.mxu0 0.0
    %412 = vmatprep.subr.mxu0 0.0
    %413 = vmatpush1.msra.mxu0 0.0
    %414 = vmatprep.subr.mxu0 0.0
    %415 = vmatpush1.msra.mxu0 0.0
    %416 = vmatprep.subr.mxu0 0.0
    %417 = vmatpush1.msra.mxu0 0.0
    %418 = vmatprep.subr.mxu0 0.0
    %419 = vmatpush1.msra.mxu0 0.0
    %420 = vmatprep.subr.mxu0 0.0
    %421 = vmatpush1.msra.mxu0 0.0
    %422 = vmatprep.subr.mxu0 0.0
    %423 = vmatpush1.msra.mxu0 0.0
    %424 = vmatprep.subr.mxu0 0.0
    %425 = vmatpush1.msra.mxu0 0.0
    %426 = vmatprep.subr.mxu0 0.0
    %427 = vmatpush1.msra.mxu0 0.0
    %428 = vmatprep.subr.mxu0 0.0
    %429 = vmatpush1.msra.mxu0 0.0
    %430 = vmatprep.subr.mxu0 0.0
    %431 = vmatpush1.msra.mxu0 0.0
    %432 = vmatprep.subr.mxu0 0.0
    %433 = vmatpush1.msra.mxu0 0.0
    %434 = vmatprep.subr.mxu0 0.0
    %435 = vmatpush1.msra.mxu0 0.0
    %436 = vmatprep.subr.mxu0 0.0
    %437 = vmatpush1.msra.mxu0 0.0
    %438 = vmatprep.subr.mxu0 0.0
    %439 = vmatpush1.msra.mxu0 0.0
    %440 = vmatprep.subr.mxu0 0.0
    %441 = vmatpush1.msra.mxu0 0.0
    %442 = vmatprep.subr.mxu0 0.0
    %443 = vmatpush1.msra.mxu0 0.0
    %444 = vmatprep.subr.mxu0 0.0
    %445 = vmatpush1.msra.mxu0 0.0
    %446 = vmatprep.subr.mxu0 0.0
    %447 = vmatpush1.msra.mxu0 0.0
    %448 = vmatprep.subr.mxu0 0.0
    %449 = vmatpush1.msra.mxu0 0.0
    %450 = vmatprep.subr.mxu0 0.0
    %451 = vmatpush1.msra.mxu0 0.0
    %452 = vmatprep.subr.mxu0 0.0
    %453 = vmatpush1.msra.mxu0 0.0
    %454 = vmatprep.subr.mxu0 0.0
    %455 = vmatpush1.msra.mxu0 0.0
    %456 = vmatprep.subr.mxu0 0.0
    %457 = vmatpush1.msra.mxu0 0.0
    %458 = vmatprep.subr.mxu0 0.0
    %459 = vmatpush1.msra.mxu0 0.0
    %460 = vmatprep.subr.mxu0 0.0
    %461 = vmatpush1.msra.mxu0 0.0
    %462 = vmatprep.mubr.f32.mxu0 0.0
    %463 = vmatmul.mubr.f32.gmra.mrb[0].mxu0 %v326
    %v464 = vpop.f32.mrb[0].mxu0
    %v465 = vadd.f32 0.0, %v464
    %v466 = vpop.f32.mrb[0].mxu0
    %467 = vdwg.mxu0
    %s468 = scalar_lea.vmem %s0, 6
    %v469 = vld [vmem:[%s468] sm:$0x3]
    %v471 = vsel %vm34, %v469, 0
    %473 = vmatprep.subr.mxu0 0.0
    %474 = vmatpush1.msra.mxu0 %v27
    %475 = vmatprep.subr.mxu0 0.0
    %476 = vmatpush1.msra.mxu0 %v28
    %477 = vmatprep.subr.mxu0 0.0
    %478 = vmatpush1.msra.mxu0 0.0
    %479 = vmatprep.subr.mxu0 0.0
    %480 = vmatpush1.msra.mxu0 0.0
    %481 = vmatprep.subr.mxu0 0.0
    %482 = vmatpush1.msra.mxu0 0.0
    %483 = vmatprep.subr.mxu0 0.0
    %484 = vmatpush1.msra.mxu0 0.0
    %485 = vmatprep.subr.mxu0 0.0
    %486 = vmatpush1.msra.mxu0 0.0
    %487 = vmatprep.subr.mxu0 0.0
    %488 = vmatpush1.msra.mxu0 0.0
    %489 = vmatprep.subr.mxu0 0.0
    %490 = vmatpush1.msra.mxu0 0.0
    %491 = vmatprep.subr.mxu0 0.0
    %492 = vmatpush1.msra.mxu0 0.0
    %493 = vmatprep.subr.mxu0 0.0
    %494 = vmatpush1.msra.mxu0 0.0
    %495 = vmatprep.subr.mxu0 0.0
    %496 = vmatpush1.msra.mxu0 0.0
    %497 = vmatprep.subr.mxu0 0.0
    %498 = vmatpush1.msra.mxu0 0.0
    %499 = vmatprep.subr.mxu0 0.0
    %500 = vmatpush1.msra.mxu0 0.0
    %501 = vmatprep.subr.mxu0 0.0
    %502 = vmatpush1.msra.mxu0 0.0
    %503 = vmatprep.subr.mxu0 0.0
    %504 = vmatpush1.msra.mxu0 0.0
    %505 = vmatprep.subr.mxu0 0.0
    %506 = vmatpush1.msra.mxu0 0.0
    %507 = vmatprep.subr.mxu0 0.0
    %508 = vmatpush1.msra.mxu0 0.0
    %509 = vmatprep.subr.mxu0 0.0
    %510 = vmatpush1.msra.mxu0 0.0
    %511 = vmatprep.subr.mxu0 0.0
    %512 = vmatpush1.msra.mxu0 0.0
    %513 = vmatprep.subr.mxu0 0.0
    %514 = vmatpush1.msra.mxu0 0.0
    %515 = vmatprep.subr.mxu0 0.0
    %516 = vmatpush1.msra.mxu0 0.0
    %517 = vmatprep.subr.mxu0 0.0
    %518 = vmatpush1.msra.mxu0 0.0
    %519 = vmatprep.subr.mxu0 0.0
    %520 = vmatpush1.msra.mxu0 0.0
    %521 = vmatprep.subr.mxu0 0.0
    %522 = vmatpush1.msra.mxu0 0.0
    %523 = vmatprep.subr.mxu0 0.0
    %524 = vmatpush1.msra.mxu0 0.0
    %525 = vmatprep.subr.mxu0 0.0
    %526 = vmatpush1.msra.mxu0 0.0
    %527 = vmatprep.subr.mxu0 0.0
    %528 = vmatpush1.msra.mxu0 0.0
    %529 = vmatprep.subr.mxu0 0.0
    %530 = vmatpush1.msra.mxu0 0.0
    %531 = vmatprep.subr.mxu0 0.0
    %532 = vmatpush1.msra.mxu0 0.0
    %533 = vmatprep.subr.mxu0 0.0
    %534 = vmatpush1.msra.mxu0 0.0
    %535 = vmatprep.subr.mxu0 0.0
    %536 = vmatpush1.msra.mxu0 0.0
    %537 = vmatprep.mubr.f32.mxu0 0.0
    %538 = vmatmul.mubr.f32.gmra.mrb[0].mxu0 %v471
    %v539 = vpop.f32.mrb[0].mxu0
    %v540 = vadd.f32 0.0, %v539
    %v541 = vpop.f32.mrb[0].mxu0
    %542 = vdwg.mxu0
    %543 = vmatprep.subr.mxu0 0.0
    %544 = vmatpush1.msra.mxu0 %v29
    %545 = vmatprep.subr.mxu0 0.0
    %546 = vmatpush1.msra.mxu0 %v30
    %547 = vmatprep.subr.mxu0 0.0
    %548 = vmatpush1.msra.mxu0 0.0
    %549 = vmatprep.subr.mxu0 0.0
    %550 = vmatpush1.msra.mxu0 0.0
    %551 = vmatprep.subr.mxu0 0.0
    %552 = vmatpush1.msra.mxu0 0.0
    %553 = vmatprep.subr.mxu0 0.0
    %554 = vmatpush1.msra.mxu0 0.0
    %555 = vmatprep.subr.mxu0 0.0
    %556 = vmatpush1.msra.mxu0 0.0
    %557 = vmatprep.subr.mxu0 0.0
    %558 = vmatpush1.msra.mxu0 0.0
    %559 = vmatprep.subr.mxu0 0.0
    %560 = vmatpush1.msra.mxu0 0.0
    %561 = vmatprep.subr.mxu0 0.0
    %562 = vmatpush1.msra.mxu0 0.0
    %563 = vmatprep.subr.mxu0 0.0
    %564 = vmatpush1.msra.mxu0 0.0
    %565 = vmatprep.subr.mxu0 0.0
    %566 = vmatpush1.msra.mxu0 0.0
    %567 = vmatprep.subr.mxu0 0.0
    %568 = vmatpush1.msra.mxu0 0.0
    %569 = vmatprep.subr.mxu0 0.0
    %570 = vmatpush1.msra.mxu0 0.0
    %571 = vmatprep.subr.mxu0 0.0
    %572 = vmatpush1.msra.mxu0 0.0
    %573 = vmatprep.subr.mxu0 0.0
    %574 = vmatpush1.msra.mxu0 0.0
    %575 = vmatprep.subr.mxu0 0.0
    %576 = vmatpush1.msra.mxu0 0.0
    %577 = vmatprep.subr.mxu0 0.0
    %578 = vmatpush1.msra.mxu0 0.0
    %579 = vmatprep.subr.mxu0 0.0
    %580 = vmatpush1.msra.mxu0 0.0
    %581 = vmatprep.subr.mxu0 0.0
    %582 = vmatpush1.msra.mxu0 0.0
    %583 = vmatprep.subr.mxu0 0.0
    %584 = vmatpush1.msra.mxu0 0.0
    %585 = vmatprep.subr.mxu0 0.0
    %586 = vmatpush1.msra.mxu0 0.0
    %587 = vmatprep.subr.mxu0 0.0
    %588 = vmatpush1.msra.mxu0 0.0
    %589 = vmatprep.subr.mxu0 0.0
    %590 = vmatpush1.msra.mxu0 0.0
    %591 = vmatprep.subr.mxu0 0.0
    %592 = vmatpush1.msra.mxu0 0.0
    %593 = vmatprep.subr.mxu0 0.0
    %594 = vmatpush1.msra.mxu0 0.0
    %595 = vmatprep.subr.mxu0 0.0
    %596 = vmatpush1.msra.mxu0 0.0
    %597 = vmatprep.subr.mxu0 0.0
    %598 = vmatpush1.msra.mxu0 0.0
    %599 = vmatprep.subr.mxu0 0.0
    %600 = vmatpush1.msra.mxu0 0.0
    %601 = vmatprep.subr.mxu0 0.0
    %602 = vmatpush1.msra.mxu0 0.0
    %603 = vmatprep.subr.mxu0 0.0
    %604 = vmatpush1.msra.mxu0 0.0
    %605 = vmatprep.subr.mxu0 0.0
    %606 = vmatpush1.msra.mxu0 0.0
    %607 = vmatprep.mubr.f32.mxu0 0.0
    %608 = vmatmul.mubr.f32.gmra.mrb[0].mxu0 %v471
    %v609 = vpop.f32.mrb[0].mxu0
    %v610 = vadd.f32 0.0, %v609
    %v611 = vpop.f32.mrb[0].mxu0
    %612 = vdwg.mxu0
    %v613 = vld [vmem:[%s1] sm:$0x1]
    %v614 = vld [vmem:[%s2] sm:$0x1]
    %v615 = vlaneseq
    %v616 = vshrl.u32 %v615, 7
    %v617 = vsub.s32 0, %v616
    %v618 = vrot.slane %v613, %v617
    %v619 = vmul.f32 %v105, %v618
    %v620 = vadd.f32 %v619, 0.0
    %v621 = vlaneseq
    %v622 = vshrl.u32 %v621, 7
    %v623 = vsub.s32 0, %v622
    %v624 = vrot.slane %v614, %v623
    %v625 = vmul.f32 %v175, %v624
    %v626 = vsub.f32 %v620, %v625
    %v627 = vmul.f32 %v105, %v624
    %v628 = vadd.f32 %v627, 0.0
    %v629 = vmul.f32 %v175, %v618
    %v630 = vadd.f32 %v628, %v629
    %v631 = vld [vmem:[%s1 + $0x4] sm:$0x1]
    %v632 = vld [vmem:[%s2 + $0x4] sm:$0x1]
    %v633 = vlaneseq
    %v634 = vshrl.u32 %v633, 7
    %v635 = vsub.s32 0, %v634
    %v636 = vrot.slane %v631, %v635
    %v637 = vmul.f32 %v250, %v636
    %v638 = vadd.f32 %v626, %v637
    %v639 = vlaneseq
    %v640 = vshrl.u32 %v639, 7
    %v641 = vsub.s32 0, %v640
    %v642 = vrot.slane %v632, %v641
    %v643 = vmul.f32 %v320, %v642
    %v644 = vsub.f32 %v638, %v643
    %v645 = vmul.f32 %v250, %v642
    %v646 = vadd.f32 %v630, %v645
    %v647 = vmul.f32 %v320, %v636
    %v648 = vadd.f32 %v646, %v647
    %v649 = vld [vmem:[%s1 + $0x8] sm:$0x1]
    %v650 = vld [vmem:[%s2 + $0x8] sm:$0x1]
    %v651 = vlaneseq
    %v652 = vshrl.u32 %v651, 7
    %v653 = vsub.s32 0, %v652
    %v654 = vrot.slane %v649, %v653
    %v655 = vmul.f32 %v395, %v654
    %v656 = vadd.f32 %v644, %v655
    %v657 = vlaneseq
    %v658 = vshrl.u32 %v657, 7
    %v659 = vsub.s32 0, %v658
    %v660 = vrot.slane %v650, %v659
    %v661 = vmul.f32 %v465, %v660
    %v662 = vsub.f32 %v656, %v661
    %v663 = vmul.f32 %v395, %v660
    %v664 = vadd.f32 %v648, %v663
    %v665 = vmul.f32 %v465, %v654
    %v666 = vadd.f32 %v664, %v665
    %v667 = vld [vmem:[%s1 + $0xc] sm:$0x1]
    %v668 = vld [vmem:[%s2 + $0xc] sm:$0x1]
    %v669 = vlaneseq
    %v670 = vshrl.u32 %v669, 7
    %v671 = vsub.s32 0, %v670
    %v672 = vrot.slane %v667, %v671
    %v673 = vmul.f32 %v540, %v672
    %v674 = vadd.f32 %v662, %v673
    %v675 = vlaneseq
    %v676 = vshrl.u32 %v675, 7
    %v677 = vsub.s32 0, %v676
    %v678 = vrot.slane %v668, %v677
    %v679 = vmul.f32 %v610, %v678
    %v680 = vsub.f32 %v674, %v679
    %v681 = vmul.f32 %v540, %v678
    %v682 = vadd.f32 %v666, %v681
    %v683 = vmul.f32 %v610, %v672
    %v684 = vadd.f32 %v682, %v683
    %vm685 = vcmask 64512
    %v687 = vsel %vm685, %v684, 0
    %689 = vmatprep.subr.mxu0 0.0
    %690 = vmatpush1.msra.mxu0 %v32
    %691 = vmatprep.subr.mxu0 0.0
    %692 = vmatpush1.msra.mxu0 0.0
    %693 = vmatprep.subr.mxu0 0.0
    %694 = vmatpush1.msra.mxu0 0.0
    %695 = vmatprep.subr.mxu0 0.0
    %696 = vmatpush1.msra.mxu0 0.0
    %697 = vmatprep.subr.mxu0 0.0
    %698 = vmatpush1.msra.mxu0 0.0
    %699 = vmatprep.subr.mxu0 0.0
    %700 = vmatpush1.msra.mxu0 0.0
    %701 = vmatprep.subr.mxu0 0.0
    %702 = vmatpush1.msra.mxu0 0.0
    %703 = vmatprep.subr.mxu0 0.0
    %704 = vmatpush1.msra.mxu0 0.0
    %705 = vmatprep.subr.mxu0 0.0
    %706 = vmatpush1.msra.mxu0 0.0
    %707 = vmatprep.subr.mxu0 0.0
    %708 = vmatpush1.msra.mxu0 0.0
    %709 = vmatprep.subr.mxu0 0.0
    %710 = vmatpush1.msra.mxu0 0.0
    %711 = vmatprep.subr.mxu0 0.0
    %712 = vmatpush1.msra.mxu0 0.0
    %713 = vmatprep.subr.mxu0 0.0
    %714 = vmatpush1.msra.mxu0 0.0
    %715 = vmatprep.subr.mxu0 0.0
    %716 = vmatpush1.msra.mxu0 0.0
    %717 = vmatprep.subr.mxu0 0.0
    %718 = vmatpush1.msra.mxu0 0.0
    %719 = vmatprep.subr.mxu0 0.0
    %720 = vmatpush1.msra.mxu0 0.0
    %721 = vmatprep.subr.mxu0 0.0
    %722 = vmatpush1.msra.mxu0 0.0
    %723 = vmatprep.subr.mxu0 0.0
    %724 = vmatpush1.msra.mxu0 0.0
    %725 = vmatprep.subr.mxu0 0.0
    %726 = vmatpush1.msra.mxu0 0.0
    %727 = vmatprep.subr.mxu0 0.0
    %728 = vmatpush1.msra.mxu0 0.0
    %729 = vmatprep.subr.mxu0 0.0
    %730 = vmatpush1.msra.mxu0 0.0
    %731 = vmatprep.subr.mxu0 0.0
    %732 = vmatpush1.msra.mxu0 0.0
    %733 = vmatprep.subr.mxu0 0.0
    %734 = vmatpush1.msra.mxu0 0.0
    %735 = vmatprep.subr.mxu0 0.0
    %736 = vmatpush1.msra.mxu0 0.0
    %737 = vmatprep.subr.mxu0 0.0
    %738 = vmatpush1.msra.mxu0 0.0
    %739 = vmatprep.subr.mxu0 0.0
    %740 = vmatpush1.msra.mxu0 0.0
    %741 = vmatprep.subr.mxu0 0.0
    %742 = vmatpush1.msra.mxu0 0.0
    %743 = vmatprep.subr.mxu0 0.0
    %744 = vmatpush1.msra.mxu0 0.0
    %745 = vmatprep.subr.mxu0 0.0
    %746 = vmatpush1.msra.mxu0 0.0
    %747 = vmatprep.subr.mxu0 0.0
    %748 = vmatpush1.msra.mxu0 0.0
    %749 = vmatprep.subr.mxu0 0.0
    %750 = vmatpush1.msra.mxu0 0.0
    %751 = vmatprep.subr.mxu0 0.0
    %752 = vmatpush1.msra.mxu0 0.0
    %753 = vmatprep.mubr.f32.mxu0 0.0
    %754 = vmatmul.mubr.f32.gmra.mrb[0].mxu0 %v687
    %v755 = vpop.f32.mrb[0].mxu0
    %v756 = vadd.f32 0.0, %v755
    %v757 = vpop.f32.mrb[0].mxu0
    %758 = vdwg.mxu0
    %v760 = vsel %vm685, %v680, 0
    %762 = vmatprep.subr.mxu0 0.0
    %763 = vmatpush1.msra.mxu0 %v31
    %764 = vmatprep.subr.mxu0 0.0
    %765 = vmatpush1.msra.mxu0 0.0
    %766 = vmatprep.subr.mxu0 0.0
    %767 = vmatpush1.msra.mxu0 0.0
    %768 = vmatprep.subr.mxu0 0.0
    %769 = vmatpush1.msra.mxu0 0.0
    %770 = vmatprep.subr.mxu0 0.0
    %771 = vmatpush1.msra.mxu0 0.0
    %772 = vmatprep.subr.mxu0 0.0
    %773 = vmatpush1.msra.mxu0 0.0
    %774 = vmatprep.subr.mxu0 0.0
    %775 = vmatpush1.msra.mxu0 0.0
    %776 = vmatprep.subr.mxu0 0.0
    %777 = vmatpush1.msra.mxu0 0.0
    %778 = vmatprep.subr.mxu0 0.0
    %779 = vmatpush1.msra.mxu0 0.0
    %780 = vmatprep.subr.mxu0 0.0
    %781 = vmatpush1.msra.mxu0 0.0
    %782 = vmatprep.subr.mxu0 0.0
    %783 = vmatpush1.msra.mxu0 0.0
    %784 = vmatprep.subr.mxu0 0.0
    %785 = vmatpush1.msra.mxu0 0.0
    %786 = vmatprep.subr.mxu0 0.0
    %787 = vmatpush1.msra.mxu0 0.0
    %788 = vmatprep.subr.mxu0 0.0
    %789 = vmatpush1.msra.mxu0 0.0
    %790 = vmatprep.subr.mxu0 0.0
    %791 = vmatpush1.msra.mxu0 0.0
    %792 = vmatprep.subr.mxu0 0.0
    %793 = vmatpush1.msra.mxu0 0.0
    %794 = vmatprep.subr.mxu0 0.0
    %795 = vmatpush1.msra.mxu0 0.0
    %796 = vmatprep.subr.mxu0 0.0
    %797 = vmatpush1.msra.mxu0 0.0
    %798 = vmatprep.subr.mxu0 0.0
    %799 = vmatpush1.msra.mxu0 0.0
    %800 = vmatprep.subr.mxu0 0.0
    %801 = vmatpush1.msra.mxu0 0.0
    %802 = vmatprep.subr.mxu0 0.0
    %803 = vmatpush1.msra.mxu0 0.0
    %804 = vmatprep.subr.mxu0 0.0
    %805 = vmatpush1.msra.mxu0 0.0
    %806 = vmatprep.subr.mxu0 0.0
    %807 = vmatpush1.msra.mxu0 0.0
    %808 = vmatprep.subr.mxu0 0.0
    %809 = vmatpush1.msra.mxu0 0.0
    %810 = vmatprep.subr.mxu0 0.0
    %811 = vmatpush1.msra.mxu0 0.0
    %812 = vmatprep.subr.mxu0 0.0
    %813 = vmatpush1.msra.mxu0 0.0
    %814 = vmatprep.subr.mxu0 0.0
    %815 = vmatpush1.msra.mxu0 0.0
    %816 = vmatprep.subr.mxu0 0.0
    %817 = vmatpush1.msra.mxu0 0.0
    %818 = vmatprep.subr.mxu0 0.0
    %819 = vmatpush1.msra.mxu0 0.0
    %820 = vmatprep.subr.mxu0 0.0
    %821 = vmatpush1.msra.mxu0 0.0
    %822 = vmatprep.subr.mxu0 0.0
    %823 = vmatpush1.msra.mxu0 0.0
    %824 = vmatprep.subr.mxu0 0.0
    %825 = vmatpush1.msra.mxu0 0.0
    %826 = vmatprep.mubr.f32.mxu0 0.0
    %827 = vmatmul.mubr.f32.gmra.mrb[0].mxu0 %v760
    %v828 = vpop.f32.mrb[0].mxu0
    %v829 = vadd.f32 %v756, %v828
    %v830 = vpop.f32.mrb[0].mxu0
    %831 = vdwg.mxu0
    %vm832 = vcmask 123904
    %833 = vst.msk [vmem:[#allocation2] sm:$0x3] %vm832, %v829
    %v834 = vld [vmem:[%s1 + $0x1] sm:$0x1]
    %v835 = vld [vmem:[%s2 + $0x1] sm:$0x1]
    %v836 = vlaneseq
    %v837 = vshrl.u32 %v836, 7
    %v838 = vsub.s32 0, %v837
    %v839 = vrot.slane %v834, %v838
    %v840 = vmul.f32 %v105, %v839
    %v841 = vadd.f32 %v840, 0.0
    %v842 = vlaneseq
    %v843 = vshrl.u32 %v842, 7
    %v844 = vsub.s32 0, %v843
    %v845 = vrot.slane %v835, %v844
    %v846 = vmul.f32 %v175, %v845
    %v847 = vsub.f32 %v841, %v846
    %v848 = vmul.f32 %v105, %v845
    %v849 = vadd.f32 %v848, 0.0
    %v850 = vmul.f32 %v175, %v839
    %v851 = vadd.f32 %v849, %v850
    %v852 = vld [vmem:[%s1 + $0x5] sm:$0x1]
    %v853 = vld [vmem:[%s2 + $0x5] sm:$0x1]
    %v854 = vlaneseq
    %v855 = vshrl.u32 %v854, 7
    %v856 = vsub.s32 0, %v855
    %v857 = vrot.slane %v852, %v856
    %v858 = vmul.f32 %v250, %v857
    %v859 = vadd.f32 %v847, %v858
    %v860 = vlaneseq
    %v861 = vshrl.u32 %v860, 7
    %v862 = vsub.s32 0, %v861
    %v863 = vrot.slane %v853, %v862
    %v864 = vmul.f32 %v320, %v863
    %v865 = vsub.f32 %v859, %v864
    %v866 = vmul.f32 %v250, %v863
    %v867 = vadd.f32 %v851, %v866
    %v868 = vmul.f32 %v320, %v857
    %v869 = vadd.f32 %v867, %v868
    %v870 = vld [vmem:[%s1 + $0x9] sm:$0x1]
    %v871 = vld [vmem:[%s2 + $0x9] sm:$0x1]
    %v872 = vlaneseq
    %v873 = vshrl.u32 %v872, 7
    %v874 = vsub.s32 0, %v873
    %v875 = vrot.slane %v870, %v874
    %v876 = vmul.f32 %v395, %v875
    %v877 = vadd.f32 %v865, %v876
    %v878 = vlaneseq
    %v879 = vshrl.u32 %v878, 7
    %v880 = vsub.s32 0, %v879
    %v881 = vrot.slane %v871, %v880
    %v882 = vmul.f32 %v465, %v881
    %v883 = vsub.f32 %v877, %v882
    %v884 = vmul.f32 %v395, %v881
    %v885 = vadd.f32 %v869, %v884
    %v886 = vmul.f32 %v465, %v875
    %v887 = vadd.f32 %v885, %v886
    %v888 = vld [vmem:[%s1 + $0xd] sm:$0x1]
    %v889 = vld [vmem:[%s2 + $0xd] sm:$0x1]
    %v890 = vlaneseq
    %v891 = vshrl.u32 %v890, 7
    %v892 = vsub.s32 0, %v891
    %v893 = vrot.slane %v888, %v892
    %v894 = vmul.f32 %v540, %v893
    %v895 = vadd.f32 %v883, %v894
    %v896 = vlaneseq
    %v897 = vshrl.u32 %v896, 7
    %v898 = vsub.s32 0, %v897
    %v899 = vrot.slane %v889, %v898
    %v900 = vmul.f32 %v610, %v899
    %v901 = vsub.f32 %v895, %v900
    %v902 = vmul.f32 %v540, %v899
    %v903 = vadd.f32 %v887, %v902
    %v904 = vmul.f32 %v610, %v893
    %v905 = vadd.f32 %v903, %v904
    %v907 = vsel %vm685, %v905, 0
    %909 = vmatprep.subr.mxu0 0.0
    %910 = vmatpush1.msra.mxu0 %v32
    %911 = vmatprep.subr.mxu0 0.0
    %912 = vmatpush1.msra.mxu0 0.0
    %913 = vmatprep.subr.mxu0 0.0
    %914 = vmatpush1.msra.mxu0 0.0
    %915 = vmatprep.subr.mxu0 0.0
    %916 = vmatpush1.msra.mxu0 0.0
    %917 = vmatprep.subr.mxu0 0.0
    %918 = vmatpush1.msra.mxu0 0.0
    %919 = vmatprep.subr.mxu0 0.0
    %920 = vmatpush1.msra.mxu0 0.0
    %921 = vmatprep.subr.mxu0 0.0
    %922 = vmatpush1.msra.mxu0 0.0
    %923 = vmatprep.subr.mxu0 0.0
    %924 = vmatpush1.msra.mxu0 0.0
    %925 = vmatprep.subr.mxu0 0.0
    %926 = vmatpush1.msra.mxu0 0.0
    %927 = vmatprep.subr.mxu0 0.0
    %928 = vmatpush1.msra.mxu0 0.0
    %929 = vmatprep.subr.mxu0 0.0
    %930 = vmatpush1.msra.mxu0 0.0
    %931 = vmatprep.subr.mxu0 0.0
    %932 = vmatpush1.msra.mxu0 0.0
    %933 = vmatprep.subr.mxu0 0.0
    %934 = vmatpush1.msra.mxu0 0.0
    %935 = vmatprep.subr.mxu0 0.0
    %936 = vmatpush1.msra.mxu0 0.0
    %937 = vmatprep.subr.mxu0 0.0
    %938 = vmatpush1.msra.mxu0 0.0
    %939 = vmatprep.subr.mxu0 0.0
    %940 = vmatpush1.msra.mxu0 0.0
    %941 = vmatprep.subr.mxu0 0.0
    %942 = vmatpush1.msra.mxu0 0.0
    %943 = vmatprep.subr.mxu0 0.0
    %944 = vmatpush1.msra.mxu0 0.0
    %945 = vmatprep.subr.mxu0 0.0
    %946 = vmatpush1.msra.mxu0 0.0
    %947 = vmatprep.subr.mxu0 0.0
    %948 = vmatpush1.msra.mxu0 0.0
    %949 = vmatprep.subr.mxu0 0.0
    %950 = vmatpush1.msra.mxu0 0.0
    %951 = vmatprep.subr.mxu0 0.0
    %952 = vmatpush1.msra.mxu0 0.0
    %953 = vmatprep.subr.mxu0 0.0
    %954 = vmatpush1.msra.mxu0 0.0
    %955 = vmatprep.subr.mxu0 0.0
    %956 = vmatpush1.msra.mxu0 0.0
    %957 = vmatprep.subr.mxu0 0.0
    %958 = vmatpush1.msra.mxu0 0.0
    %959 = vmatprep.subr.mxu0 0.0
    %960 = vmatpush1.msra.mxu0 0.0
    %961 = vmatprep.subr.mxu0 0.0
    %962 = vmatpush1.msra.mxu0 0.0
    %963 = vmatprep.subr.mxu0 0.0
    %964 = vmatpush1.msra.mxu0 0.0
    %965 = vmatprep.subr.mxu0 0.0
    %966 = vmatpush1.msra.mxu0 0.0
    %967 = vmatprep.subr.mxu0 0.0
    %968 = vmatpush1.msra.mxu0 0.0
    %969 = vmatprep.subr.mxu0 0.0
    %970 = vmatpush1.msra.mxu0 0.0
    %971 = vmatprep.subr.mxu0 0.0
    %972 = vmatpush1.msra.mxu0 0.0
    %973 = vmatprep.mubr.f32.mxu0 0.0
    %974 = vmatmul.mubr.f32.gmra.mrb[0].mxu0 %v907
    %v975 = vpop.f32.mrb[0].mxu0
    %v976 = vadd.f32 0.0, %v975
    %v977 = vpop.f32.mrb[0].mxu0
    %978 = vdwg.mxu0
    %v980 = vsel %vm685, %v901, 0
    %982 = vmatprep.subr.mxu0 0.0
    %983 = vmatpush1.msra.mxu0 %v31
    %984 = vmatprep.subr.mxu0 0.0
    %985 = vmatpush1.msra.mxu0 0.0
    %986 = vmatprep.subr.mxu0 0.0
    %987 = vmatpush1.msra.mxu0 0.0
    %988 = vmatprep.subr.mxu0 0.0
    %989 = vmatpush1.msra.mxu0 0.0
    %990 = vmatprep.subr.mxu0 0.0
    %991 = vmatpush1.msra.mxu0 0.0
    %992 = vmatprep.subr.mxu0 0.0
    %993 = vmatpush1.msra.mxu0 0.0
    %994 = vmatprep.subr.mxu0 0.0
    %995 = vmatpush1.msra.mxu0 0.0
    %996 = vmatprep.subr.mxu0 0.0
    %997 = vmatpush1.msra.mxu0 0.0
    %998 = vmatprep.subr.mxu0 0.0
    %999 = vmatpush1.msra.mxu0 0.0
    %1000 = vmatprep.subr.mxu0 0.0
    %1001 = vmatpush1.msra.mxu0 0.0
    %1002 = vmatprep.subr.mxu0 0.0
    %1003 = vmatpush1.msra.mxu0 0.0
    %1004 = vmatprep.subr.mxu0 0.0
    %1005 = vmatpush1.msra.mxu0 0.0
    %1006 = vmatprep.subr.mxu0 0.0
    %1007 = vmatpush1.msra.mxu0 0.0
    %1008 = vmatprep.subr.mxu0 0.0
    %1009 = vmatpush1.msra.mxu0 0.0
    %1010 = vmatprep.subr.mxu0 0.0
    %1011 = vmatpush1.msra.mxu0 0.0
    %1012 = vmatprep.subr.mxu0 0.0
    %1013 = vmatpush1.msra.mxu0 0.0
    %1014 = vmatprep.subr.mxu0 0.0
    %1015 = vmatpush1.msra.mxu0 0.0
    %1016 = vmatprep.subr.mxu0 0.0
    %1017 = vmatpush1.msra.mxu0 0.0
    %1018 = vmatprep.subr.mxu0 0.0
    %1019 = vmatpush1.msra.mxu0 0.0
    %1020 = vmatprep.subr.mxu0 0.0
    %1021 = vmatpush1.msra.mxu0 0.0
    %1022 = vmatprep.subr.mxu0 0.0
    %1023 = vmatpush1.msra.mxu0 0.0
    %1024 = vmatprep.subr.mxu0 0.0
    %1025 = vmatpush1.msra.mxu0 0.0
    %1026 = vmatprep.subr.mxu0 0.0
    %1027 = vmatpush1.msra.mxu0 0.0
    %1028 = vmatprep.subr.mxu0 0.0
    %1029 = vmatpush1.msra.mxu0 0.0
    %1030 = vmatprep.subr.mxu0 0.0
    %1031 = vmatpush1.msra.mxu0 0.0
    %1032 = vmatprep.subr.mxu0 0.0
    %1033 = vmatpush1.msra.mxu0 0.0
    %1034 = vmatprep.subr.mxu0 0.0
    %1035 = vmatpush1.msra.mxu0 0.0
    %1036 = vmatprep.subr.mxu0 0.0
    %1037 = vmatpush1.msra.mxu0 0.0
    %1038 = vmatprep.subr.mxu0 0.0
    %1039 = vmatpush1.msra.mxu0 0.0
    %1040 = vmatprep.subr.mxu0 0.0
    %1041 = vmatpush1.msra.mxu0 0.0
    %1042 = vmatprep.subr.mxu0 0.0
    %1043 = vmatpush1.msra.mxu0 0.0
    %1044 = vmatprep.subr.mxu0 0.0
    %1045 = vmatpush1.msra.mxu0 0.0
    %1046 = vmatprep.mubr.f32.mxu0 0.0
    %1047 = vmatmul.mubr.f32.gmra.mrb[0].mxu0 %v980
    %v1048 = vpop.f32.mrb[0].mxu0
    %v1049 = vadd.f32 %v976, %v1048
    %v1050 = vpop.f32.mrb[0].mxu0
    %1051 = vdwg.mxu0
    %s1052 = scalar_lea.vmem [#allocation2], 2
    %1053 = vst.msk [vmem:[%s1052] sm:$0x3] %vm832, %v1049
    %v1054 = vld [vmem:[%s1 + $0x2] sm:$0x1]
    %v1055 = vld [vmem:[%s2 + $0x2] sm:$0x1]
    %v1056 = vlaneseq
    %v1057 = vshrl.u32 %v1056, 7
    %v1058 = vsub.s32 0, %v1057
    %v1059 = vrot.slane %v1054, %v1058
    %v1060 = vmul.f32 %v105, %v1059
    %v1061 = vadd.f32 %v1060, 0.0
    %v1062 = vlaneseq
    %v1063 = vshrl.u32 %v1062, 7
    %v1064 = vsub.s32 0, %v1063
    %v1065 = vrot.slane %v1055, %v1064
    %v1066 = vmul.f32 %v175, %v1065
    %v1067 = vsub.f32 %v1061, %v1066
    %v1068 = vmul.f32 %v105, %v1065
    %v1069 = vadd.f32 %v1068, 0.0
    %v1070 = vmul.f32 %v175, %v1059
    %v1071 = vadd.f32 %v1069, %v1070
    %v1072 = vld [vmem:[%s1 + $0x6] sm:$0x1]
    %v1073 = vld [vmem:[%s2 + $0x6] sm:$0x1]
    %v1074 = vlaneseq
    %v1075 = vshrl.u32 %v1074, 7
    %v1076 = vsub.s32 0, %v1075
    %v1077 = vrot.slane %v1072, %v1076
    %v1078 = vmul.f32 %v250, %v1077
    %v1079 = vadd.f32 %v1067, %v1078
    %v1080 = vlaneseq
    %v1081 = vshrl.u32 %v1080, 7
    %v1082 = vsub.s32 0, %v1081
    %v1083 = vrot.slane %v1073, %v1082
    %v1084 = vmul.f32 %v320, %v1083
    %v1085 = vsub.f32 %v1079, %v1084
    %v1086 = vmul.f32 %v250, %v1083
    %v1087 = vadd.f32 %v1071, %v1086
    %v1088 = vmul.f32 %v320, %v1077
    %v1089 = vadd.f32 %v1087, %v1088
    %v1090 = vld [vmem:[%s1 + $0xa] sm:$0x1]
    %v1091 = vld [vmem:[%s2 + $0xa] sm:$0x1]
    %v1092 = vlaneseq
    %v1093 = vshrl.u32 %v1092, 7
    %v1094 = vsub.s32 0, %v1093
    %v1095 = vrot.slane %v1090, %v1094
    %v1096 = vmul.f32 %v395, %v1095
    %v1097 = vadd.f32 %v1085, %v1096
    %v1098 = vlaneseq
    %v1099 = vshrl.u32 %v1098, 7
    %v1100 = vsub.s32 0, %v1099
    %v1101 = vrot.slane %v1091, %v1100
    %v1102 = vmul.f32 %v465, %v1101
    %v1103 = vsub.f32 %v1097, %v1102
    %v1104 = vmul.f32 %v395, %v1101
    %v1105 = vadd.f32 %v1089, %v1104
    %v1106 = vmul.f32 %v465, %v1095
    %v1107 = vadd.f32 %v1105, %v1106
    %v1108 = vld [vmem:[%s1 + $0xe] sm:$0x1]
    %v1109 = vld [vmem:[%s2 + $0xe] sm:$0x1]
    %v1110 = vlaneseq
    %v1111 = vshrl.u32 %v1110, 7
    %v1112 = vsub.s32 0, %v1111
    %v1113 = vrot.slane %v1108, %v1112
    %v1114 = vmul.f32 %v540, %v1113
    %v1115 = vadd.f32 %v1103, %v1114
    %v1116 = vlaneseq
    %v1117 = vshrl.u32 %v1116, 7
    %v1118 = vsub.s32 0, %v1117
    %v1119 = vrot.slane %v1109, %v1118
    %v1120 = vmul.f32 %v610, %v1119
    %v1121 = vsub.f32 %v1115, %v1120
    %v1122 = vmul.f32 %v540, %v1119
    %v1123 = vadd.f32 %v1107, %v1122
    %v1124 = vmul.f32 %v610, %v1113
    %v1125 = vadd.f32 %v1123, %v1124
    %v1127 = vsel %vm685, %v1125, 0
    %1129 = vmatprep.subr.mxu0 0.0
    %1130 = vmatpush1.msra.mxu0 %v32
    %1131 = vmatprep.subr.mxu0 0.0
    %1132 = vmatpush1.msra.mxu0 0.0
    %1133 = vmatprep.subr.mxu0 0.0
    %1134 = vmatpush1.msra.mxu0 0.0
    %1135 = vmatprep.subr.mxu0 0.0
    %1136 = vmatpush1.msra.mxu0 0.0
    %1137 = vmatprep.subr.mxu0 0.0
    %1138 = vmatpush1.msra.mxu0 0.0
    %1139 = vmatprep.subr.mxu0 0.0
    %1140 = vmatpush1.msra.mxu0 0.0
    %1141 = vmatprep.subr.mxu0 0.0
    %1142 = vmatpush1.msra.mxu0 0.0
    %1143 = vmatprep.subr.mxu0 0.0
    %1144 = vmatpush1.msra.mxu0 0.0
    %1145 = vmatprep.subr.mxu0 0.0
    %1146 = vmatpush1.msra.mxu0 0.0
    %1147 = vmatprep.subr.mxu0 0.0
    %1148 = vmatpush1.msra.mxu0 0.0
    %1149 = vmatprep.subr.mxu0 0.0
    %1150 = vmatpush1.msra.mxu0 0.0
    %1151 = vmatprep.subr.mxu0 0.0
    %1152 = vmatpush1.msra.mxu0 0.0
    %1153 = vmatprep.subr.mxu0 0.0
    %1154 = vmatpush1.msra.mxu0 0.0
    %1155 = vmatprep.subr.mxu0 0.0
    %1156 = vmatpush1.msra.mxu0 0.0
    %1157 = vmatprep.subr.mxu0 0.0
    %1158 = vmatpush1.msra.mxu0 0.0
    %1159 = vmatprep.subr.mxu0 0.0
    %1160 = vmatpush1.msra.mxu0 0.0
    %1161 = vmatprep.subr.mxu0 0.0
    %1162 = vmatpush1.msra.mxu0 0.0
    %1163 = vmatprep.subr.mxu0 0.0
    %1164 = vmatpush1.msra.mxu0 0.0
    %1165 = vmatprep.subr.mxu0 0.0
    %1166 = vmatpush1.msra.mxu0 0.0
    %1167 = vmatprep.subr.mxu0 0.0
    %1168 = vmatpush1.msra.mxu0 0.0
    %1169 = vmatprep.subr.mxu0 0.0
    %1170 = vmatpush1.msra.mxu0 0.0
    %1171 = vmatprep.subr.mxu0 0.0
    %1172 = vmatpush1.msra.mxu0 0.0
    %1173 = vmatprep.subr.mxu0 0.0
    %1174 = vmatpush1.msra.mxu0 0.0
    %1175 = vmatprep.subr.mxu0 0.0
    %1176 = vmatpush1.msra.mxu0 0.0
    %1177 = vmatprep.subr.mxu0 0.0
    %1178 = vmatpush1.msra.mxu0 0.0
    %1179 = vmatprep.subr.mxu0 0.0
    %1180 = vmatpush1.msra.mxu0 0.0
    %1181 = vmatprep.subr.mxu0 0.0
    %1182 = vmatpush1.msra.mxu0 0.0
    %1183 = vmatprep.subr.mxu0 0.0
    %1184 = vmatpush1.msra.mxu0 0.0
    %1185 = vmatprep.subr.mxu0 0.0
    %1186 = vmatpush1.msra.mxu0 0.0
    %1187 = vmatprep.subr.mxu0 0.0
    %1188 = vmatpush1.msra.mxu0 0.0
    %1189 = vmatprep.subr.mxu0 0.0
    %1190 = vmatpush1.msra.mxu0 0.0
    %1191 = vmatprep.subr.mxu0 0.0
    %1192 = vmatpush1.msra.mxu0 0.0
    %1193 = vmatprep.mubr.f32.mxu0 0.0
    %1194 = vmatmul.mubr.f32.gmra.mrb[0].mxu0 %v1127
    %v1195 = vpop.f32.mrb[0].mxu0
    %v1196 = vadd.f32 0.0, %v1195
    %v1197 = vpop.f32.mrb[0].mxu0
    %1198 = vdwg.mxu0
    %v1200 = vsel %vm685, %v1121, 0
    %1202 = vmatprep.subr.mxu0 0.0
    %1203 = vmatpush1.msra.mxu0 %v31
    %1204 = vmatprep.subr.mxu0 0.0
    %1205 = vmatpush1.msra.mxu0 0.0
    %1206 = vmatprep.subr.mxu0 0.0
    %1207 = vmatpush1.msra.mxu0 0.0
    %1208 = vmatprep.subr.mxu0 0.0
    %1209 = vmatpush1.msra.mxu0 0.0
    %1210 = vmatprep.subr.mxu0 0.0
    %1211 = vmatpush1.msra.mxu0 0.0
    %1212 = vmatprep.subr.mxu0 0.0
    %1213 = vmatpush1.msra.mxu0 0.0
    %1214 = vmatprep.subr.mxu0 0.0
    %1215 = vmatpush1.msra.mxu0 0.0
    %1216 = vmatprep.subr.mxu0 0.0
    %1217 = vmatpush1.msra.mxu0 0.0
    %1218 = vmatprep.subr.mxu0 0.0
    %1219 = vmatpush1.msra.mxu0 0.0
    %1220 = vmatprep.subr.mxu0 0.0
    %1221 = vmatpush1.msra.mxu0 0.0
    %1222 = vmatprep.subr.mxu0 0.0
    %1223 = vmatpush1.msra.mxu0 0.0
    %1224 = vmatprep.subr.mxu0 0.0
    %1225 = vmatpush1.msra.mxu0 0.0
    %1226 = vmatprep.subr.mxu0 0.0
    %1227 = vmatpush1.msra.mxu0 0.0
    %1228 = vmatprep.subr.mxu0 0.0
    %1229 = vmatpush1.msra.mxu0 0.0
    %1230 = vmatprep.subr.mxu0 0.0
    %1231 = vmatpush1.msra.mxu0 0.0
    %1232 = vmatprep.subr.mxu0 0.0
    %1233 = vmatpush1.msra.mxu0 0.0
    %1234 = vmatprep.subr.mxu0 0.0
    %1235 = vmatpush1.msra.mxu0 0.0
    %1236 = vmatprep.subr.mxu0 0.0
    %1237 = vmatpush1.msra.mxu0 0.0
    %1238 = vmatprep.subr.mxu0 0.0
    %1239 = vmatpush1.msra.mxu0 0.0
    %1240 = vmatprep.subr.mxu0 0.0
    %1241 = vmatpush1.msra.mxu0 0.0
    %1242 = vmatprep.subr.mxu0 0.0
    %1243 = vmatpush1.msra.mxu0 0.0
    %1244 = vmatprep.subr.mxu0 0.0
    %1245 = vmatpush1.msra.mxu0 0.0
    %1246 = vmatprep.subr.mxu0 0.0
    %1247 = vmatpush1.msra.mxu0 0.0
    %1248 = vmatprep.subr.mxu0 0.0
    %1249 = vmatpush1.msra.mxu0 0.0
    %1250 = vmatprep.subr.mxu0 0.0
    %1251 = vmatpush1.msra.mxu0 0.0
    %1252 = vmatprep.subr.mxu0 0.0
    %1253 = vmatpush1.msra.mxu0 0.0
    %1254 = vmatprep.subr.mxu0 0.0
    %1255 = vmatpush1.msra.mxu0 0.0
    %1256 = vmatprep.subr.mxu0 0.0
    %1257 = vmatpush1.msra.mxu0 0.0
    %1258 = vmatprep.subr.mxu0 0.0
    %1259 = vmatpush1.msra.mxu0 0.0
    %1260 = vmatprep.subr.mxu0 0.0
    %1261 = vmatpush1.msra.mxu0 0.0
    %1262 = vmatprep.subr.mxu0 0.0
    %1263 = vmatpush1.msra.mxu0 0.0
    %1264 = vmatprep.subr.mxu0 0.0
    %1265 = vmatpush1.msra.mxu0 0.0
    %1266 = vmatprep.mubr.f32.mxu0 0.0
    %1267 = vmatmul.mubr.f32.gmra.mrb[0].mxu0 %v1200
    %v1268 = vpop.f32.mrb[0].mxu0
    %v1269 = vadd.f32 %v1196, %v1268
    %v1270 = vpop.f32.mrb[0].mxu0
    %1271 = vdwg.mxu0
    %s1272 = scalar_lea.vmem [#allocation2], 4
    %1273 = vst.msk [vmem:[%s1272] sm:$0x3] %vm832, %v1269
    %v1274 = vld [vmem:[%s1 + $0x3] sm:$0x1]
    %v1275 = vld [vmem:[%s2 + $0x3] sm:$0x1]
    %v1276 = vlaneseq
    %v1277 = vshrl.u32 %v1276, 7
    %v1278 = vsub.s32 0, %v1277
    %v1279 = vrot.slane %v1274, %v1278
    %v1280 = vmul.f32 %v105, %v1279
    %v1281 = vadd.f32 %v1280, 0.0
    %v1282 = vlaneseq
    %v1283 = vshrl.u32 %v1282, 7
    %v1284 = vsub.s32 0, %v1283
    %v1285 = vrot.slane %v1275, %v1284
    %v1286 = vmul.f32 %v175, %v1285
    %v1287 = vsub.f32 %v1281, %v1286
    %v1288 = vmul.f32 %v105, %v1285
    %v1289 = vadd.f32 %v1288, 0.0
    %v1290 = vmul.f32 %v175, %v1279
    %v1291 = vadd.f32 %v1289, %v1290
    %v1292 = vld [vmem:[%s1 + $0x7] sm:$0x1]
    %v1293 = vld [vmem:[%s2 + $0x7] sm:$0x1]
    %v1294 = vlaneseq
    %v1295 = vshrl.u32 %v1294, 7
    %v1296 = vsub.s32 0, %v1295
    %v1297 = vrot.slane %v1292, %v1296
    %v1298 = vmul.f32 %v250, %v1297
    %v1299 = vadd.f32 %v1287, %v1298
    %v1300 = vlaneseq
    %v1301 = vshrl.u32 %v1300, 7
    %v1302 = vsub.s32 0, %v1301
    %v1303 = vrot.slane %v1293, %v1302
    %v1304 = vmul.f32 %v320, %v1303
    %v1305 = vsub.f32 %v1299, %v1304
    %v1306 = vmul.f32 %v250, %v1303
    %v1307 = vadd.f32 %v1291, %v1306
    %v1308 = vmul.f32 %v320, %v1297
    %v1309 = vadd.f32 %v1307, %v1308
    %v1310 = vld [vmem:[%s1 + $0xb] sm:$0x1]
    %v1311 = vld [vmem:[%s2 + $0xb] sm:$0x1]
    %v1312 = vlaneseq
    %v1313 = vshrl.u32 %v1312, 7
    %v1314 = vsub.s32 0, %v1313
    %v1315 = vrot.slane %v1310, %v1314
    %v1316 = vmul.f32 %v395, %v1315
    %v1317 = vadd.f32 %v1305, %v1316
    %v1318 = vlaneseq
    %v1319 = vshrl.u32 %v1318, 7
    %v1320 = vsub.s32 0, %v1319
    %v1321 = vrot.slane %v1311, %v1320
    %v1322 = vmul.f32 %v465, %v1321
    %v1323 = vsub.f32 %v1317, %v1322
    %v1324 = vmul.f32 %v395, %v1321
    %v1325 = vadd.f32 %v1309, %v1324
    %v1326 = vmul.f32 %v465, %v1315
    %v1327 = vadd.f32 %v1325, %v1326
    %v1328 = vld [vmem:[%s1 + $0xf] sm:$0x1]
    %v1329 = vld [vmem:[%s2 + $0xf] sm:$0x1]
    %v1330 = vlaneseq
    %v1331 = vshrl.u32 %v1330, 7
    %v1332 = vsub.s32 0, %v1331
    %v1333 = vrot.slane %v1328, %v1332
    %v1334 = vmul.f32 %v540, %v1333
    %v1335 = vadd.f32 %v1323, %v1334
    %v1336 = vlaneseq
    %v1337 = vshrl.u32 %v1336, 7
    %v1338 = vsub.s32 0, %v1337
    %v1339 = vrot.slane %v1329, %v1338
    %v1340 = vmul.f32 %v610, %v1339
    %v1341 = vsub.f32 %v1335, %v1340
    %v1342 = vmul.f32 %v540, %v1339
    %v1343 = vadd.f32 %v1327, %v1342
    %v1344 = vmul.f32 %v610, %v1333
    %v1345 = vadd.f32 %v1343, %v1344
    %v1347 = vsel %vm685, %v1345, 0
    %1349 = vmatprep.subr.mxu0 0.0
    %1350 = vmatpush1.msra.mxu0 %v32
    %1351 = vmatprep.subr.mxu0 0.0
    %1352 = vmatpush1.msra.mxu0 0.0
    %1353 = vmatprep.subr.mxu0 0.0
    %1354 = vmatpush1.msra.mxu0 0.0
    %1355 = vmatprep.subr.mxu0 0.0
    %1356 = vmatpush1.msra.mxu0 0.0
    %1357 = vmatprep.subr.mxu0 0.0
    %1358 = vmatpush1.msra.mxu0 0.0
    %1359 = vmatprep.subr.mxu0 0.0
    %1360 = vmatpush1.msra.mxu0 0.0
    %1361 = vmatprep.subr.mxu0 0.0
    %1362 = vmatpush1.msra.mxu0 0.0
    %1363 = vmatprep.subr.mxu0 0.0
    %1364 = vmatpush1.msra.mxu0 0.0
    %1365 = vmatprep.subr.mxu0 0.0
    %1366 = vmatpush1.msra.mxu0 0.0
    %1367 = vmatprep.subr.mxu0 0.0
    %1368 = vmatpush1.msra.mxu0 0.0
    %1369 = vmatprep.subr.mxu0 0.0
    %1370 = vmatpush1.msra.mxu0 0.0
    %1371 = vmatprep.subr.mxu0 0.0
    %1372 = vmatpush1.msra.mxu0 0.0
    %1373 = vmatprep.subr.mxu0 0.0
    %1374 = vmatpush1.msra.mxu0 0.0
    %1375 = vmatprep.subr.mxu0 0.0
    %1376 = vmatpush1.msra.mxu0 0.0
    %1377 = vmatprep.subr.mxu0 0.0
    %1378 = vmatpush1.msra.mxu0 0.0
    %1379 = vmatprep.subr.mxu0 0.0
    %1380 = vmatpush1.msra.mxu0 0.0
    %1381 = vmatprep.subr.mxu0 0.0
    %1382 = vmatpush1.msra.mxu0 0.0
    %1383 = vmatprep.subr.mxu0 0.0
    %1384 = vmatpush1.msra.mxu0 0.0
    %1385 = vmatprep.subr.mxu0 0.0
    %1386 = vmatpush1.msra.mxu0 0.0
    %1387 = vmatprep.subr.mxu0 0.0
    %1388 = vmatpush1.msra.mxu0 0.0
    %1389 = vmatprep.subr.mxu0 0.0
    %1390 = vmatpush1.msra.mxu0 0.0
    %1391 = vmatprep.subr.mxu0 0.0
    %1392 = vmatpush1.msra.mxu0 0.0
    %1393 = vmatprep.subr.mxu0 0.0
    %1394 = vmatpush1.msra.mxu0 0.0
    %1395 = vmatprep.subr.mxu0 0.0
    %1396 = vmatpush1.msra.mxu0 0.0
    %1397 = vmatprep.subr.mxu0 0.0
    %1398 = vmatpush1.msra.mxu0 0.0
    %1399 = vmatprep.subr.mxu0 0.0
    %1400 = vmatpush1.msra.mxu0 0.0
    %1401 = vmatprep.subr.mxu0 0.0
    %1402 = vmatpush1.msra.mxu0 0.0
    %1403 = vmatprep.subr.mxu0 0.0
    %1404 = vmatpush1.msra.mxu0 0.0
    %1405 = vmatprep.subr.mxu0 0.0
    %1406 = vmatpush1.msra.mxu0 0.0
    %1407 = vmatprep.subr.mxu0 0.0
    %1408 = vmatpush1.msra.mxu0 0.0
    %1409 = vmatprep.subr.mxu0 0.0
    %1410 = vmatpush1.msra.mxu0 0.0
    %1411 = vmatprep.subr.mxu0 0.0
    %1412 = vmatpush1.msra.mxu0 0.0
    %1413 = vmatprep.mubr.f32.mxu0 0.0
    %1414 = vmatmul.mubr.f32.gmra.mrb[0].mxu0 %v1347
    %v1415 = vpop.f32.mrb[0].mxu0
    %v1416 = vadd.f32 0.0, %v1415
    %v1417 = vpop.f32.mrb[0].mxu0
    %1418 = vdwg.mxu0
    %v1420 = vsel %vm685, %v1341, 0
    %1422 = vmatprep.subr.mxu0 0.0
    %1423 = vmatpush1.msra.mxu0 %v31
    %1424 = vmatprep.subr.mxu0 0.0
    %1425 = vmatpush1.msra.mxu0 0.0
    %1426 = vmatprep.subr.mxu0 0.0
    %1427 = vmatpush1.msra.mxu0 0.0
    %1428 = vmatprep.subr.mxu0 0.0
    %1429 = vmatpush1.msra.mxu0 0.0
    %1430 = vmatprep.subr.mxu0 0.0
    %1431 = vmatpush1.msra.mxu0 0.0
    %1432 = vmatprep.subr.mxu0 0.0
    %1433 = vmatpush1.msra.mxu0 0.0
    %1434 = vmatprep.subr.mxu0 0.0
    %1435 = vmatpush1.msra.mxu0 0.0
    %1436 = vmatprep.subr.mxu0 0.0
    %1437 = vmatpush1.msra.mxu0 0.0
    %1438 = vmatprep.subr.mxu0 0.0
    %1439 = vmatpush1.msra.mxu0 0.0
    %1440 = vmatprep.subr.mxu0 0.0
    %1441 = vmatpush1.msra.mxu0 0.0
    %1442 = vmatprep.subr.mxu0 0.0
    %1443 = vmatpush1.msra.mxu0 0.0
    %1444 = vmatprep.subr.mxu0 0.0
    %1445 = vmatpush1.msra.mxu0 0.0
    %1446 = vmatprep.subr.mxu0 0.0
    %1447 = vmatpush1.msra.mxu0 0.0
    %1448 = vmatprep.subr.mxu0 0.0
    %1449 = vmatpush1.msra.mxu0 0.0
    %1450 = vmatprep.subr.mxu0 0.0
    %1451 = vmatpush1.msra.mxu0 0.0
    %1452 = vmatprep.subr.mxu0 0.0
    %1453 = vmatpush1.msra.mxu0 0.0
    %1454 = vmatprep.subr.mxu0 0.0
    %1455 = vmatpush1.msra.mxu0 0.0
    %1456 = vmatprep.subr.mxu0 0.0
    %1457 = vmatpush1.msra.mxu0 0.0
    %1458 = vmatprep.subr.mxu0 0.0
    %1459 = vmatpush1.msra.mxu0 0.0
    %1460 = vmatprep.subr.mxu0 0.0
    %1461 = vmatpush1.msra.mxu0 0.0
    %1462 = vmatprep.subr.mxu0 0.0
    %1463 = vmatpush1.msra.mxu0 0.0
    %1464 = vmatprep.subr.mxu0 0.0
    %1465 = vmatpush1.msra.mxu0 0.0
    %1466 = vmatprep.subr.mxu0 0.0
    %1467 = vmatpush1.msra.mxu0 0.0
    %1468 = vmatprep.subr.mxu0 0.0
    %1469 = vmatpush1.msra.mxu0 0.0
    %1470 = vmatprep.subr.mxu0 0.0
    %1471 = vmatpush1.msra.mxu0 0.0
    %1472 = vmatprep.subr.mxu0 0.0
    %1473 = vmatpush1.msra.mxu0 0.0
    %1474 = vmatprep.subr.mxu0 0.0
    %1475 = vmatpush1.msra.mxu0 0.0
    %1476 = vmatprep.subr.mxu0 0.0
    %1477 = vmatpush1.msra.mxu0 0.0
    %1478 = vmatprep.subr.mxu0 0.0
    %1479 = vmatpush1.msra.mxu0 0.0
    %1480 = vmatprep.subr.mxu0 0.0
    %1481 = vmatpush1.msra.mxu0 0.0
    %1482 = vmatprep.subr.mxu0 0.0
    %1483 = vmatpush1.msra.mxu0 0.0
    %1484 = vmatprep.subr.mxu0 0.0
    %1485 = vmatpush1.msra.mxu0 0.0
    %1486 = vmatprep.mubr.f32.mxu0 0.0
    %1487 = vmatmul.mubr.f32.gmra.mrb[0].mxu0 %v1420
    %v1488 = vpop.f32.mrb[0].mxu0
    %v1489 = vadd.f32 %v1416, %v1488
    %v1490 = vpop.f32.mrb[0].mxu0
    %1491 = vdwg.mxu0
    %s1492 = scalar_lea.vmem [#allocation2], 6
    %1493 = vst.msk [vmem:[%s1492] sm:$0x3] %vm832, %v1489
    // Predicated region
    $region30: #{tpu_custom_call.1} parent=1 // pred_check
      _
    $region31: #{tpu_custom_call.1} parent=1 // pred_check_branch
      %1495 = sbr.rel (0) target = $region33
    $region32: #{tpu_custom_call.1} parent=1 // pred_region
      %s1497 = ssub.s32 128, 128
      %1498 = vsyncadd [#allocation3], %s1497
      %s1499 = sshll.u32 [#allocation2], 4
      %s1500 = int_to_ptr.vmem [resolvable:$true] %s1499
      %1505 = dma.vmem_to_hbm [thread:$0]  %s1500, 128, %s7, [#allocation3], 32, 32, 2
    $region33: #{tpu_custom_call.1} parent=1 // pred_fallthru
      _
    // Predicated region
    $region34: #{tpu_custom_call.1} parent=1 // pred_check
      _
    $region35: #{tpu_custom_call.1} parent=1 // pred_check_branch
      %1507 = sbr.rel (0) target = $region37
    $region36: #{tpu_custom_call.1} parent=1 // pred_region
      %1508 = dma.done [#allocation3], 128
    $region37: #{tpu_custom_call.1} parent=1 // pred_fallthru
      _
    %1509 = vsyncpa [#allocation3], 1

</llo_original>
